<compile_context>
chip_gen: v5e
topology: v5e:2x2
jax: 0.10.0
libtpu: 0.0.40
codegen_flags: <defaults>
</compile_context>

<pallas_src>
import jax
import jax.numpy as jnp
from jax.experimental import pallas as pl
from jax.experimental.pallas import tpu as pltpu

IN_FEATURES = 1024
HIDDEN = 32
OUT_FEATURES = 10


def _mlp_kernel(x_ref, w1_ref, b1_ref, w2_ref, b2_ref, o_ref):
    x = x_ref[...]
    # Cast W1 to the streamed activation dtype (resident in VMEM -> free); the MXU
    # accumulates in f32 via preferred_element_type.
    w1 = w1_ref[...].astype(x.dtype)
    prec = (jax.lax.Precision.HIGHEST
            if x.dtype == jnp.float32 else jax.lax.Precision.DEFAULT)
    h = jnp.dot(x, w1, preferred_element_type=jnp.float32, precision=prec)
    # Keep bias + sigmoid in f32 (EUP/VPU slots are idle; v5e has no bf16 VPU).
    h = jax.nn.sigmoid(h + b1_ref[...].astype(jnp.float32))
    out = jnp.dot(h, w2_ref[...].astype(jnp.float32),
                  preferred_element_type=jnp.float32,
                  precision=jax.lax.Precision.HIGHEST)
    o_ref[...] = (out + b2_ref[...].astype(jnp.float32)).astype(o_ref.dtype)


def _tile_and_vmem_limit():
    """Pick a batch tile / scoped-VMEM limit appropriate for the chip generation."""
    try:
        vmem_bytes = pltpu.get_tpu_info().vmem_capacity_bytes
    except Exception:
        vmem_bytes = 64 << 20  # conservative fallback (v7x-sized VMEM)
    if vmem_bytes >= (128 << 20):
        # v5e / v6e: 128 MiB physical VMEM.  2 bufs x 2048x1024x4 B = 16 MiB of f32 x;
        # raise the scoped limit so v5e's 16 MiB default doesn't reject it.
        return 2048, 64 << 20
    # v7x: 64 MiB physical / 32 MiB default scope.  2048-row tile still fits easily
    # (16 MiB f32 / 8 MiB bf16 double-buffer + <1 MiB params) with a 40 MiB scope.
    return 2048, 40 << 20


def medical_model_forward(inputs, w1, b1, w2, b2, *, batch_tile=None):
    """inputs: any shape with total elements divisible by 1024 (mirrors view(-1, 1024)).

    The input dtype is respected (no wrapper cast): pass f32 for exact PyTorch
    parity, or bf16 to halve streamed HBM bytes (~2x wall time on this kernel).
    """
    x = inputs.reshape(-1, IN_FEATURES)
    batch = x.shape[0]

    default_tb, vmem_limit = _tile_and_vmem_limit()
    tb = batch_tile if batch_tile is not None else default_tb
    # If the whole batch fits in one tile, use a single full-extent block (no
    # partial-block machinery, any batch size valid).  Otherwise stream tb-row
    # tiles and let Pallas mask the partial last block -- no jnp.pad copy of x.
    tb = min(tb, batch)

    grid = (pl.cdiv(batch, tb),)
    itemsize = jnp.dtype(x.dtype).itemsize
    param_bytes = (IN_FEATURES * HIDDEN + HIDDEN + HIDDEN * OUT_FEATURES + OUT_FEATURES) * 4
    cost = pl.CostEstimate(
        flops=2 * batch * (IN_FEATURES * HIDDEN + HIDDEN * OUT_FEATURES),
        transcendentals=batch * HIDDEN,
        bytes_accessed=batch * IN_FEATURES * itemsize + batch * OUT_FEATURES * 4 + param_bytes,
    )

    out = pl.pallas_call(
        _mlp_kernel,
        out_shape=jax.ShapeDtypeStruct((batch, OUT_FEATURES), jnp.float32),
        grid_spec=pltpu.PrefetchScalarGridSpec(
            num_scalar_prefetch=0,
            grid=grid,
            in_specs=[
                # x tiles stream through VMEM (default 2-deep double-buffering).
                pl.BlockSpec((tb, IN_FEATURES), lambda i: (i, 0)),
                # Weights / biases stay resident: same block every grid step.
                pl.BlockSpec((IN_FEATURES, HIDDEN), lambda i: (0, 0)),
                pl.BlockSpec((1, HIDDEN), lambda i: (0, 0)),
                pl.BlockSpec((HIDDEN, OUT_FEATURES), lambda i: (0, 0)),
                pl.BlockSpec((1, OUT_FEATURES), lambda i: (0, 0)),
            ],
            out_specs=pl.BlockSpec((tb, OUT_FEATURES), lambda i: (i, 0)),
        ),
        compiler_params=pltpu.CompilerParams(
            dimension_semantics=("parallel",),       # megacore sharding on v7x
            vmem_limit_bytes=vmem_limit,
        ),
        cost_estimate=cost,
    )(x, w1, b1, w2, b2)

    # Partial-last-block output rows (if any) were masked on writeback; this slice
    # is the semantic guard that keeps the kernel's padded rows unobservable.
    return out[:batch]


def init_params(key):
    """Deterministic parameter init matching nn.Linear default (uniform +/- 1/sqrt(fan_in))."""
    k1, k2, k3, k4 = jax.random.split(key, 4)
    bound1 = 1.0 / jnp.sqrt(float(IN_FEATURES))
    bound2 = 1.0 / jnp.sqrt(float(HIDDEN))
    # Stored transposed relative to PyTorch ([out, in] -> [in, out]) so the kernel does x @ W.
    w1 = jax.random.uniform(k1, (IN_FEATURES, HIDDEN), jnp.float32, -bound1, bound1)
    b1 = jax.random.uniform(k2, (1, HIDDEN), jnp.float32, -bound1, bound1)
    w2 = jax.random.uniform(k3, (HIDDEN, OUT_FEATURES), jnp.float32, -bound2, bound2)
    b2 = jax.random.uniform(k4, (1, OUT_FEATURES), jnp.float32, -bound2, bound2)
    return w1, b1, w2, b2


def _reference(x, w1, b1, w2, b2):
    xf = x.reshape(-1, IN_FEATURES).astype(jnp.float32)
    return jax.nn.sigmoid(xf @ w1 + b1) @ w2 + b2


if __name__ == "__main__":
    key = jax.random.PRNGKey(0)
    pkey, xkey, ykey = jax.random.split(key, 3)
    w1, b1, w2, b2 = init_params(pkey)

    # Example input: (2, 4, 16, 16) -> view(-1, 1024) gives a batch of 2 rows.
    x = jax.random.normal(xkey, (2, 4, 16, 16), jnp.float32)
    out = jax.block_until_ready(medical_model_forward(x, w1, b1, w2, b2))
    assert out.shape == (2, OUT_FEATURES)
    assert jnp.allclose(out, _reference(x, w1, b1, w2, b2), atol=1e-5, rtol=1e-5)

    # Ragged batch (not a multiple of 8) without any jnp.pad copy of x.
    x2 = jax.random.normal(ykey, (13, IN_FEATURES), jnp.float32)
    out2 = jax.block_until_ready(medical_model_forward(x2, w1, b1, w2, b2))
    assert out2.shape == (13, OUT_FEATURES)
    assert jnp.allclose(out2, _reference(x2, w1, b1, w2, b2), atol=1e-5, rtol=1e-5)

    # bf16 streamed-activation path (halves HBM bytes on the BW-bound stream).
    xb = x2.astype(jnp.bfloat16)
    out3 = jax.block_until_ready(medical_model_forward(xb, w1, b1, w2, b2))
    assert out3.shape == (13, OUT_FEATURES)
    assert jnp.allclose(out3, _reference(xb, w1, b1, w2, b2), atol=2e-2, rtol=2e-2)

    print("KERNEL_OK")
</pallas_src>

<mosaic_0001>
module attributes {stable_mosaic.version = 11 : i64} {
  func.func @_mlp_kernel(%arg0: i32, %arg1: memref<2x1024xf32, #tpu.memory_space<vmem>>, %arg2: memref<1024x32xf32, #tpu.memory_space<vmem>>, %arg3: memref<1x32xf32, #tpu.memory_space<vmem>>, %arg4: memref<32x10xf32, #tpu.memory_space<vmem>>, %arg5: memref<1x10xf32, #tpu.memory_space<vmem>>, %arg6: memref<2x10xf32, #tpu.memory_space<vmem>>) attributes {dimension_semantics = [#tpu.dimension_semantics<parallel>], iteration_bounds = array<i64: 1>, scalar_prefetch = 0 : i64, scratch_operands = 0 : i64, tpu.core_type = #tpu.core_type<tc>, window_params = [{transform_indices = @transform_0, window_bounds = array<i64: 2, 1024>}, {pipeline_mode = #tpu.pipeline_mode<synchronous>, transform_indices = @transform_1, window_bounds = array<i64: 1024, 32>}, {pipeline_mode = #tpu.pipeline_mode<synchronous>, transform_indices = @transform_2, window_bounds = array<i64: 1, 32>}, {pipeline_mode = #tpu.pipeline_mode<synchronous>, transform_indices = @transform_3, window_bounds = array<i64: 32, 10>}, {pipeline_mode = #tpu.pipeline_mode<synchronous>, transform_indices = @transform_4, window_bounds = array<i64: 1, 10>}, {transform_indices = @transform_5, window_bounds = array<i64: 2, 10>}]} {
    %c0 = arith.constant 0 : index
    %c0_0 = arith.constant 0 : index
    %0 = vector.load %arg1[%c0, %c0_0] : memref<2x1024xf32, #tpu.memory_space<vmem>>, vector<2x1024xf32>
    %c0_1 = arith.constant 0 : index
    %c0_2 = arith.constant 0 : index
    %1 = vector.load %arg2[%c0_1, %c0_2] : memref<1024x32xf32, #tpu.memory_space<vmem>>, vector<1024x32xf32>
    %cst = arith.constant dense<0.000000e+00> : vector<2x32xf32>
    %2 = tpu.matmul %0, %1, %cst {dimension_numbers = #tpu.dot_dimension_numbers<[1], [0], [0], [1], [0, 0, 1, 1], [], []>, precision = #tpu.contract_precision<fp32>} : vector<2x1024xf32>, vector<1024x32xf32>, vector<2x32xf32> -> vector<2x32xf32>
    %c0_3 = arith.constant 0 : index
    %c0_4 = arith.constant 0 : index
    %3 = vector.load %arg3[%c0_3, %c0_4] : memref<1x32xf32, #tpu.memory_space<vmem>>, vector<1x32xf32>
    %4 = vector.broadcast %3 : vector<1x32xf32> to vector<2x32xf32>
    %5 = arith.addf %2, %4 : vector<2x32xf32>
    %6 = arith.negf %5 : vector<2x32xf32>
    %7 = math.exp %6 : vector<2x32xf32>
    %cst_5 = arith.constant 1.000000e+00 : f32
    %8 = vector.broadcast %cst_5 : f32 to vector<2x32xf32>
    %9 = arith.addf %8, %7 : vector<2x32xf32>
    %10 = arith.divf %8, %9 : vector<2x32xf32>
    %c0_6 = arith.constant 0 : index
    %c0_7 = arith.constant 0 : index
    %11 = vector.load %arg4[%c0_6, %c0_7] : memref<32x10xf32, #tpu.memory_space<vmem>>, vector<32x10xf32>
    %cst_8 = arith.constant dense<0.000000e+00> : vector<2x10xf32>
    %12 = tpu.matmul %10, %11, %cst_8 {dimension_numbers = #tpu.dot_dimension_numbers<[1], [0], [0], [1], [0, 0, 1, 1], [], []>, precision = #tpu.contract_precision<fp32>} : vector<2x32xf32>, vector<32x10xf32>, vector<2x10xf32> -> vector<2x10xf32>
    %c0_9 = arith.constant 0 : index
    %c0_10 = arith.constant 0 : index
    %13 = vector.load %arg5[%c0_9, %c0_10] : memref<1x10xf32, #tpu.memory_space<vmem>>, vector<1x10xf32>
    %14 = vector.broadcast %13 : vector<1x10xf32> to vector<2x10xf32>
    %15 = arith.addf %12, %14 : vector<2x10xf32>
    %c0_11 = arith.constant 0 : index
    %c0_12 = arith.constant 0 : index
    %16 = vector.load %arg6[%c0_11, %c0_12] : memref<2x10xf32, #tpu.memory_space<vmem>>, vector<2x10xf32>
    tpu.vector_store %arg6[%c0_11, %c0_12], %15 {strides = array<i32>} : memref<2x10xf32, #tpu.memory_space<vmem>>, vector<2x10xf32>,
    return
  }
  func.func @transform_0(%arg0: i32) -> (i32, i32) {
    %c0_i32 = arith.constant 0 : i32
    %c0_i32_0 = arith.constant 0 : i32
    return %arg0, %c0_i32 : i32, i32
  }
  func.func @transform_1(%arg0: i32) -> (i32, i32) {
    %c0_i32 = arith.constant 0 : i32
    %c0_i32_0 = arith.constant 0 : i32
    %c0_i32_1 = arith.constant 0 : i32
    return %c0_i32, %c0_i32_0 : i32, i32
  }
  func.func @transform_2(%arg0: i32) -> (i32, i32) {
    %c0_i32 = arith.constant 0 : i32
    %c0_i32_0 = arith.constant 0 : i32
    %c0_i32_1 = arith.constant 0 : i32
    return %c0_i32, %c0_i32_0 : i32, i32
  }
  func.func @transform_3(%arg0: i32) -> (i32, i32) {
    %c0_i32 = arith.constant 0 : i32
    %c0_i32_0 = arith.constant 0 : i32
    %c0_i32_1 = arith.constant 0 : i32
    return %c0_i32, %c0_i32_0 : i32, i32
  }
  func.func @transform_4(%arg0: i32) -> (i32, i32) {
    %c0_i32 = arith.constant 0 : i32
    %c0_i32_0 = arith.constant 0 : i32
    %c0_i32_1 = arith.constant 0 : i32
    return %c0_i32, %c0_i32_0 : i32, i32
  }
  func.func @transform_5(%arg0: i32) -> (i32, i32) {
    %c0_i32 = arith.constant 0 : i32
    %c0_i32_0 = arith.constant 0 : i32
    return %arg0, %c0_i32 : i32, i32
  }
}

</mosaic_0001>

<llo_original>
// kernel: tpu_custom_call.1
$region0: #{tpu_custom_call.1}
  #allocation0 [shape = 'u32[]', space=smem, size = 0x4, offset = 0x4, fixed_abs, tag = 'smem constant byte address 0x4 - core index']
  #allocation1 [shape = 'u32[72,128]{1,0:T(1,128)}', space=vmem, size = 0x9000, scoped, tag = 'internal scratch']
  %s0 = inlined_call_operand.vmem [shape: f32[2,1024], index: 0, kind: input, shape index: {}]
  %s1 = inlined_call_operand.vmem [shape: f32[1024,32], index: 1, kind: input, shape index: {}]
  %s2 = inlined_call_operand.vmem [shape: f32[1,32], index: 2, kind: input, shape index: {}]
  %s3 = inlined_call_operand.vmem [shape: f32[32,10], index: 3, kind: input, shape index: {}]
  %s4 = inlined_call_operand.vmem [shape: f32[1,10], index: 4, kind: input, shape index: {}]
  %s5 = inlined_call_operand.hbm [shape: f32[2,10], index: 5, kind: output, shape index: {}]
  %s6 = sld [smem:[#allocation0]]
  $region30: #{tpu_custom_call.1} parent=0
    _
  %s8 = ssub.s32 1, %s6
  %s9 = scalar_select 0, %s8, %s6
  $region1: #{tpu_custom_call.1} parent=0
    #allocation2 [shape = 'u8[1024]{0}', space=vmem, size = 0x400, scoped, tag = 'output window, operand 0, single buffered']
    #allocation3 [shape = 's32[1]{0}', space=sflag, size = 0x4, scoped, tag = 'scoped memory for tpu_custom_call.1']
    %10 = vsyncpa [#allocation3], 0
    // Predicated region
    $region2: #{tpu_custom_call.1} parent=1 // pred_check
      _
    $region3: #{tpu_custom_call.1} parent=1 // pred_check_branch
      %12 = sbr.rel (0) target = $region5
    $region4: #{tpu_custom_call.1} parent=1 // pred_region
      _
    $region5: #{tpu_custom_call.1} parent=1 // pred_fallthru
      _
    // Predicated region
    $region6: #{tpu_custom_call.1} parent=1 // pred_check
      _
    $region7: #{tpu_custom_call.1} parent=1 // pred_check_branch
      %14 = sbr.rel (0) target = $region9
    $region8: #{tpu_custom_call.1} parent=1 // pred_region
      _
    $region9: #{tpu_custom_call.1} parent=1 // pred_fallthru
      _
    // Predicated region
    $region10: #{tpu_custom_call.1} parent=1 // pred_check
      _
    $region11: #{tpu_custom_call.1} parent=1 // pred_check_branch
      %16 = sbr.rel (0) target = $region13
    $region12: #{tpu_custom_call.1} parent=1 // pred_region
      _
    $region13: #{tpu_custom_call.1} parent=1 // pred_fallthru
      _
    // Predicated region
    $region14: #{tpu_custom_call.1} parent=1 // pred_check
      _
    $region15: #{tpu_custom_call.1} parent=1 // pred_check_branch
      %18 = sbr.rel (0) target = $region17
    $region16: #{tpu_custom_call.1} parent=1 // pred_region
      _
    $region17: #{tpu_custom_call.1} parent=1 // pred_fallthru
      _
    // Predicated region
    $region18: #{tpu_custom_call.1} parent=1 // pred_check
      _
    $region19: #{tpu_custom_call.1} parent=1 // pred_check_branch
      %20 = sbr.rel (0) target = $region21
    $region20: #{tpu_custom_call.1} parent=1 // pred_region
      _
    $region21: #{tpu_custom_call.1} parent=1 // pred_fallthru
      _
    %v21 = vld [vmem:[%s0] sm:$0xff]
    %v22 = vld [vmem:[%s0 + $0x8] sm:$0xff]
    %v23 = vld [vmem:[%s1] sm:$0xff]
    %v24 = vld [vmem:[%s1 + $0x8] sm:$0xff]
    %v25 = vld [vmem:[%s1 + $0x10] sm:$0xff]
    %v26 = vld [vmem:[%s1 + $0x18] sm:$0xff]
    %v27 = vld [vmem:[%s1 + $0x20] sm:$0xff]
    %v28 = vld [vmem:[%s1 + $0x28] sm:$0xff]
    %v29 = vld [vmem:[%s1 + $0x30] sm:$0xff]
    %v30 = vld [vmem:[%s1 + $0x38] sm:$0xff]
    %v31 = vld [vmem:[%s1 + $0x40] sm:$0xff]
    %v32 = vld [vmem:[%s1 + $0x48] sm:$0xff]
    %v33 = vld [vmem:[%s1 + $0x50] sm:$0xff]
    %v34 = vld [vmem:[%s1 + $0x58] sm:$0xff]
    %v35 = vld [vmem:[%s1 + $0x60] sm:$0xff]
    %v36 = vld [vmem:[%s1 + $0x68] sm:$0xff]
    %v37 = vld [vmem:[%s1 + $0x70] sm:$0xff]
    %v38 = vld [vmem:[%s1 + $0x78] sm:$0xff]
    %v39 = vld [vmem:[%s1 + $0x80] sm:$0xff]
    %v40 = vld [vmem:[%s1 + $0x88] sm:$0xff]
    %v41 = vld [vmem:[%s1 + $0x90] sm:$0xff]
    %v42 = vld [vmem:[%s1 + $0x98] sm:$0xff]
    %v43 = vld [vmem:[%s1 + $0xa0] sm:$0xff]
    %v44 = vld [vmem:[%s1 + $0xa8] sm:$0xff]
    %v45 = vld [vmem:[%s1 + $0xb0] sm:$0xff]
    %v46 = vld [vmem:[%s1 + $0xb8] sm:$0xff]
    %v47 = vld [vmem:[%s1 + $0xc0] sm:$0xff]
    %v48 = vld [vmem:[%s1 + $0xc8] sm:$0xff]
    %v49 = vld [vmem:[%s1 + $0xd0] sm:$0xff]
    %v50 = vld [vmem:[%s1 + $0xd8] sm:$0xff]
    %v51 = vld [vmem:[%s1 + $0xe0] sm:$0xff]
    %v52 = vld [vmem:[%s1 + $0xe8] sm:$0xff]
    %v53 = vld [vmem:[%s1 + $0xf0] sm:$0xff]
    %v54 = vld [vmem:[%s1 + $0xf8] sm:$0xff]
    %v55 = vld [vmem:[%s1 + $0x100] sm:$0xff]
    %v56 = vld [vmem:[%s1 + $0x108] sm:$0xff]
    %v57 = vld [vmem:[%s1 + $0x110] sm:$0xff]
    %v58 = vld [vmem:[%s1 + $0x118] sm:$0xff]
    %v59 = vld [vmem:[%s1 + $0x120] sm:$0xff]
    %v60 = vld [vmem:[%s1 + $0x128] sm:$0xff]
    %v61 = vld [vmem:[%s1 + $0x130] sm:$0xff]
    %v62 = vld [vmem:[%s1 + $0x138] sm:$0xff]
    %v63 = vld [vmem:[%s1 + $0x140] sm:$0xff]
    %v64 = vld [vmem:[%s1 + $0x148] sm:$0xff]
    %v65 = vld [vmem:[%s1 + $0x150] sm:$0xff]
    %v66 = vld [vmem:[%s1 + $0x158] sm:$0xff]
    %v67 = vld [vmem:[%s1 + $0x160] sm:$0xff]
    %v68 = vld [vmem:[%s1 + $0x168] sm:$0xff]
    %v69 = vld [vmem:[%s1 + $0x170] sm:$0xff]
    %v70 = vld [vmem:[%s1 + $0x178] sm:$0xff]
    %v71 = vld [vmem:[%s1 + $0x180] sm:$0xff]
    %v72 = vld [vmem:[%s1 + $0x188] sm:$0xff]
    %v73 = vld [vmem:[%s1 + $0x190] sm:$0xff]
    %v74 = vld [vmem:[%s1 + $0x198] sm:$0xff]
    %v75 = vld [vmem:[%s1 + $0x1a0] sm:$0xff]
    %v76 = vld [vmem:[%s1 + $0x1a8] sm:$0xff]
    %v77 = vld [vmem:[%s1 + $0x1b0] sm:$0xff]
    %v78 = vld [vmem:[%s1 + $0x1b8] sm:$0xff]
    %v79 = vld [vmem:[%s1 + $0x1c0] sm:$0xff]
    %v80 = vld [vmem:[%s1 + $0x1c8] sm:$0xff]
    %v81 = vld [vmem:[%s1 + $0x1d0] sm:$0xff]
    %v82 = vld [vmem:[%s1 + $0x1d8] sm:$0xff]
    %v83 = vld [vmem:[%s1 + $0x1e0] sm:$0xff]
    %v84 = vld [vmem:[%s1 + $0x1e8] sm:$0xff]
    %v85 = vld [vmem:[%s1 + $0x1f0] sm:$0xff]
    %v86 = vld [vmem:[%s1 + $0x1f8] sm:$0xff]
    %v87 = vld [vmem:[%s1 + $0x200] sm:$0xff]
    %v88 = vld [vmem:[%s1 + $0x208] sm:$0xff]
    %v89 = vld [vmem:[%s1 + $0x210] sm:$0xff]
    %v90 = vld [vmem:[%s1 + $0x218] sm:$0xff]
    %v91 = vld [vmem:[%s1 + $0x220] sm:$0xff]
    %v92 = vld [vmem:[%s1 + $0x228] sm:$0xff]
    %v93 = vld [vmem:[%s1 + $0x230] sm:$0xff]
    %v94 = vld [vmem:[%s1 + $0x238] sm:$0xff]
    %v95 = vld [vmem:[%s1 + $0x240] sm:$0xff]
    %v96 = vld [vmem:[%s1 + $0x248] sm:$0xff]
    %v97 = vld [vmem:[%s1 + $0x250] sm:$0xff]
    %v98 = vld [vmem:[%s1 + $0x258] sm:$0xff]
    %v99 = vld [vmem:[%s1 + $0x260] sm:$0xff]
    %v100 = vld [vmem:[%s1 + $0x268] sm:$0xff]
    %v101 = vld [vmem:[%s1 + $0x270] sm:$0xff]
    %v102 = vld [vmem:[%s1 + $0x278] sm:$0xff]
    %v103 = vld [vmem:[%s1 + $0x280] sm:$0xff]
    %v104 = vld [vmem:[%s1 + $0x288] sm:$0xff]
    %v105 = vld [vmem:[%s1 + $0x290] sm:$0xff]
    %v106 = vld [vmem:[%s1 + $0x298] sm:$0xff]
    %v107 = vld [vmem:[%s1 + $0x2a0] sm:$0xff]
    %v108 = vld [vmem:[%s1 + $0x2a8] sm:$0xff]
    %v109 = vld [vmem:[%s1 + $0x2b0] sm:$0xff]
    %v110 = vld [vmem:[%s1 + $0x2b8] sm:$0xff]
    %v111 = vld [vmem:[%s1 + $0x2c0] sm:$0xff]
    %v112 = vld [vmem:[%s1 + $0x2c8] sm:$0xff]
    %v113 = vld [vmem:[%s1 + $0x2d0] sm:$0xff]
    %v114 = vld [vmem:[%s1 + $0x2d8] sm:$0xff]
    %v115 = vld [vmem:[%s1 + $0x2e0] sm:$0xff]
    %v116 = vld [vmem:[%s1 + $0x2e8] sm:$0xff]
    %v117 = vld [vmem:[%s1 + $0x2f0] sm:$0xff]
    %v118 = vld [vmem:[%s1 + $0x2f8] sm:$0xff]
    %v119 = vld [vmem:[%s1 + $0x300] sm:$0xff]
    %v120 = vld [vmem:[%s1 + $0x308] sm:$0xff]
    %v121 = vld [vmem:[%s1 + $0x310] sm:$0xff]
    %v122 = vld [vmem:[%s1 + $0x318] sm:$0xff]
    %v123 = vld [vmem:[%s1 + $0x320] sm:$0xff]
    %v124 = vld [vmem:[%s1 + $0x328] sm:$0xff]
    %v125 = vld [vmem:[%s1 + $0x330] sm:$0xff]
    %v126 = vld [vmem:[%s1 + $0x338] sm:$0xff]
    %v127 = vld [vmem:[%s1 + $0x340] sm:$0xff]
    %v128 = vld [vmem:[%s1 + $0x348] sm:$0xff]
    %v129 = vld [vmem:[%s1 + $0x350] sm:$0xff]
    %v130 = vld [vmem:[%s1 + $0x358] sm:$0xff]
    %v131 = vld [vmem:[%s1 + $0x360] sm:$0xff]
    %v132 = vld [vmem:[%s1 + $0x368] sm:$0xff]
    %v133 = vld [vmem:[%s1 + $0x370] sm:$0xff]
    %v134 = vld [vmem:[%s1 + $0x378] sm:$0xff]
    %v135 = vld [vmem:[%s1 + $0x380] sm:$0xff]
    %v136 = vld [vmem:[%s1 + $0x388] sm:$0xff]
    %v137 = vld [vmem:[%s1 + $0x390] sm:$0xff]
    %v138 = vld [vmem:[%s1 + $0x398] sm:$0xff]
    %v139 = vld [vmem:[%s1 + $0x3a0] sm:$0xff]
    %v140 = vld [vmem:[%s1 + $0x3a8] sm:$0xff]
    %v141 = vld [vmem:[%s1 + $0x3b0] sm:$0xff]
    %v142 = vld [vmem:[%s1 + $0x3b8] sm:$0xff]
    %v143 = vld [vmem:[%s1 + $0x3c0] sm:$0xff]
    %v144 = vld [vmem:[%s1 + $0x3c8] sm:$0xff]
    %v145 = vld [vmem:[%s1 + $0x3d0] sm:$0xff]
    %v146 = vld [vmem:[%s1 + $0x3d8] sm:$0xff]
    %v147 = vld [vmem:[%s1 + $0x3e0] sm:$0xff]
    %v148 = vld [vmem:[%s1 + $0x3e8] sm:$0xff]
    %v149 = vld [vmem:[%s1 + $0x3f0] sm:$0xff]
    %v150 = vld [vmem:[%s1 + $0x3f8] sm:$0xff]
    %v151 = vld [vmem:[%s2] sm:$0x1]
    %v153 = vperm.slane %v151, 0
    %157 = vst [vmem:[#allocation1] ss:$4 sm:$0xff] %v21
    %s158 = scalar_lea.vmem [#allocation1], 32
    %159 = vst [vmem:[%s158] ss:$4 sm:$0xff] %v22
    %v160 = vld.sshfl [vmem:[#allocation1] sm:$0xff pattern:$0x73625140]
    %v161 = vld.sshfl [vmem:[#allocation1 + $0x8] sm:$0xff pattern:$0x73625140]
    %v162 = vld.sshfl [vmem:[#allocation1 + $0x10] sm:$0xff pattern:$0x73625140]
    %v163 = vld.sshfl [vmem:[#allocation1 + $0x18] sm:$0xff pattern:$0x73625140]
    %v164 = vld.sshfl [vmem:[#allocation1 + $0x20] sm:$0xff pattern:$0x73625140]
    %v165 = vld.sshfl [vmem:[#allocation1 + $0x28] sm:$0xff pattern:$0x73625140]
    %v166 = vld.sshfl [vmem:[#allocation1 + $0x30] sm:$0xff pattern:$0x73625140]
    %v167 = vld.sshfl [vmem:[#allocation1 + $0x38] sm:$0xff pattern:$0x73625140]
    %v176 = vand.u32 %v38, 4294901760
    %177 = vmatpush.msra.mxu0 %v176
    %v178 = vand.u32 %v37, 4294901760
    %179 = vmatpush.msra.mxu0 %v178
    %v180 = vand.u32 %v36, 4294901760
    %181 = vmatpush.msra.mxu0 %v180
    %v182 = vand.u32 %v35, 4294901760
    %183 = vmatpush.msra.mxu0 %v182
    %v184 = vand.u32 %v34, 4294901760
    %185 = vmatpush.msra.mxu0 %v184
    %v186 = vand.u32 %v33, 4294901760
    %187 = vmatpush.msra.mxu0 %v186
    %v188 = vand.u32 %v32, 4294901760
    %189 = vmatpush.msra.mxu0 %v188
    %v190 = vand.u32 %v31, 4294901760
    %191 = vmatpush.msra.mxu0 %v190
    %v192 = vand.u32 %v30, 4294901760
    %193 = vmatpush.msra.mxu0 %v192
    %v194 = vand.u32 %v29, 4294901760
    %195 = vmatpush.msra.mxu0 %v194
    %v196 = vand.u32 %v28, 4294901760
    %197 = vmatpush.msra.mxu0 %v196
    %v198 = vand.u32 %v27, 4294901760
    %199 = vmatpush.msra.mxu0 %v198
    %v200 = vand.u32 %v26, 4294901760
    %201 = vmatpush.msra.mxu0 %v200
    %v202 = vand.u32 %v25, 4294901760
    %203 = vmatpush.msra.mxu0 %v202
    %v204 = vand.u32 %v24, 4294901760
    %205 = vmatpush.msra.mxu0 %v204
    %v206 = vand.u32 %v23, 4294901760
    %207 = vmatpush.msra.mxu0 %v206
    %v208 = vand.u32 %v160, 4294901760
    %v209 = vsub.f32 %v160, %v208
    %v210 = vand.u32 %v209, 4294901760
    %v211 = vsub.f32 %v209, %v210
    %v212 = vand.u32 %v211, 4294901760
    %213 = vmatmul.f32.gmra.mxu0 %v212
    %v214 = vpop.f32.mrf.mxu0
    %v215 = vadd.f32 %v153, %v214
    %216 = vdwg.mxu0
    %v217 = vand.u32 %v38, 4294901760
    %v218 = vsub.f32 %v38, %v217
    %v219 = vand.u32 %v218, 4294901760
    %v220 = vsub.f32 %v218, %v219
    %v221 = vand.u32 %v220, 4294901760
    %222 = vmatpush.msra.mxu0 %v221
    %v223 = vand.u32 %v37, 4294901760
    %v224 = vsub.f32 %v37, %v223
    %v225 = vand.u32 %v224, 4294901760
    %v226 = vsub.f32 %v224, %v225
    %v227 = vand.u32 %v226, 4294901760
    %228 = vmatpush.msra.mxu0 %v227
    %v229 = vand.u32 %v36, 4294901760
    %v230 = vsub.f32 %v36, %v229
    %v231 = vand.u32 %v230, 4294901760
    %v232 = vsub.f32 %v230, %v231
    %v233 = vand.u32 %v232, 4294901760
    %234 = vmatpush.msra.mxu0 %v233
    %v235 = vand.u32 %v35, 4294901760
    %v236 = vsub.f32 %v35, %v235
    %v237 = vand.u32 %v236, 4294901760
    %v238 = vsub.f32 %v236, %v237
    %v239 = vand.u32 %v238, 4294901760
    %240 = vmatpush.msra.mxu0 %v239
    %v241 = vand.u32 %v34, 4294901760
    %v242 = vsub.f32 %v34, %v241
    %v243 = vand.u32 %v242, 4294901760
    %v244 = vsub.f32 %v242, %v243
    %v245 = vand.u32 %v244, 4294901760
    %246 = vmatpush.msra.mxu0 %v245
    %v247 = vand.u32 %v33, 4294901760
    %v248 = vsub.f32 %v33, %v247
    %v249 = vand.u32 %v248, 4294901760
    %v250 = vsub.f32 %v248, %v249
    %v251 = vand.u32 %v250, 4294901760
    %252 = vmatpush.msra.mxu0 %v251
    %v253 = vand.u32 %v32, 4294901760
    %v254 = vsub.f32 %v32, %v253
    %v255 = vand.u32 %v254, 4294901760
    %v256 = vsub.f32 %v254, %v255
    %v257 = vand.u32 %v256, 4294901760
    %258 = vmatpush.msra.mxu0 %v257
    %v259 = vand.u32 %v31, 4294901760
    %v260 = vsub.f32 %v31, %v259
    %v261 = vand.u32 %v260, 4294901760
    %v262 = vsub.f32 %v260, %v261
    %v263 = vand.u32 %v262, 4294901760
    %264 = vmatpush.msra.mxu0 %v263
    %v265 = vand.u32 %v30, 4294901760
    %v266 = vsub.f32 %v30, %v265
    %v267 = vand.u32 %v266, 4294901760
    %v268 = vsub.f32 %v266, %v267
    %v269 = vand.u32 %v268, 4294901760
    %270 = vmatpush.msra.mxu0 %v269
    %v271 = vand.u32 %v29, 4294901760
    %v272 = vsub.f32 %v29, %v271
    %v273 = vand.u32 %v272, 4294901760
    %v274 = vsub.f32 %v272, %v273
    %v275 = vand.u32 %v274, 4294901760
    %276 = vmatpush.msra.mxu0 %v275
    %v277 = vand.u32 %v28, 4294901760
    %v278 = vsub.f32 %v28, %v277
    %v279 = vand.u32 %v278, 4294901760
    %v280 = vsub.f32 %v278, %v279
    %v281 = vand.u32 %v280, 4294901760
    %282 = vmatpush.msra.mxu0 %v281
    %v283 = vand.u32 %v27, 4294901760
    %v284 = vsub.f32 %v27, %v283
    %v285 = vand.u32 %v284, 4294901760
    %v286 = vsub.f32 %v284, %v285
    %v287 = vand.u32 %v286, 4294901760
    %288 = vmatpush.msra.mxu0 %v287
    %v289 = vand.u32 %v26, 4294901760
    %v290 = vsub.f32 %v26, %v289
    %v291 = vand.u32 %v290, 4294901760
    %v292 = vsub.f32 %v290, %v291
    %v293 = vand.u32 %v292, 4294901760
    %294 = vmatpush.msra.mxu0 %v293
    %v295 = vand.u32 %v25, 4294901760
    %v296 = vsub.f32 %v25, %v295
    %v297 = vand.u32 %v296, 4294901760
    %v298 = vsub.f32 %v296, %v297
    %v299 = vand.u32 %v298, 4294901760
    %300 = vmatpush.msra.mxu0 %v299
    %v301 = vand.u32 %v24, 4294901760
    %v302 = vsub.f32 %v24, %v301
    %v303 = vand.u32 %v302, 4294901760
    %v304 = vsub.f32 %v302, %v303
    %v305 = vand.u32 %v304, 4294901760
    %306 = vmatpush.msra.mxu0 %v305
    %v307 = vand.u32 %v23, 4294901760
    %v308 = vsub.f32 %v23, %v307
    %v309 = vand.u32 %v308, 4294901760
    %v310 = vsub.f32 %v308, %v309
    %v311 = vand.u32 %v310, 4294901760
    %312 = vmatpush.msra.mxu0 %v311
    %v313 = vand.u32 %v160, 4294901760
    %314 = vmatmul.f32.gmra.mxu0 %v313
    %v315 = vpop.f32.mrf.mxu0
    %v316 = vadd.f32 %v215, %v315
    %317 = vdwg.mxu0
    %v318 = vand.u32 %v38, 4294901760
    %v319 = vsub.f32 %v38, %v318
    %320 = vmatpush.msra.mxu0 %v319
    %v321 = vand.u32 %v37, 4294901760
    %v322 = vsub.f32 %v37, %v321
    %323 = vmatpush.msra.mxu0 %v322
    %v324 = vand.u32 %v36, 4294901760
    %v325 = vsub.f32 %v36, %v324
    %326 = vmatpush.msra.mxu0 %v325
    %v327 = vand.u32 %v35, 4294901760
    %v328 = vsub.f32 %v35, %v327
    %329 = vmatpush.msra.mxu0 %v328
    %v330 = vand.u32 %v34, 4294901760
    %v331 = vsub.f32 %v34, %v330
    %332 = vmatpush.msra.mxu0 %v331
    %v333 = vand.u32 %v33, 4294901760
    %v334 = vsub.f32 %v33, %v333
    %335 = vmatpush.msra.mxu0 %v334
    %v336 = vand.u32 %v32, 4294901760
    %v337 = vsub.f32 %v32, %v336
    %338 = vmatpush.msra.mxu0 %v337
    %v339 = vand.u32 %v31, 4294901760
    %v340 = vsub.f32 %v31, %v339
    %341 = vmatpush.msra.mxu0 %v340
    %v342 = vand.u32 %v30, 4294901760
    %v343 = vsub.f32 %v30, %v342
    %344 = vmatpush.msra.mxu0 %v343
    %v345 = vand.u32 %v29, 4294901760
    %v346 = vsub.f32 %v29, %v345
    %347 = vmatpush.msra.mxu0 %v346
    %v348 = vand.u32 %v28, 4294901760
    %v349 = vsub.f32 %v28, %v348
    %350 = vmatpush.msra.mxu0 %v349
    %v351 = vand.u32 %v27, 4294901760
    %v352 = vsub.f32 %v27, %v351
    %353 = vmatpush.msra.mxu0 %v352
    %v354 = vand.u32 %v26, 4294901760
    %v355 = vsub.f32 %v26, %v354
    %356 = vmatpush.msra.mxu0 %v355
    %v357 = vand.u32 %v25, 4294901760
    %v358 = vsub.f32 %v25, %v357
    %359 = vmatpush.msra.mxu0 %v358
    %v360 = vand.u32 %v24, 4294901760
    %v361 = vsub.f32 %v24, %v360
    %362 = vmatpush.msra.mxu0 %v361
    %v363 = vand.u32 %v23, 4294901760
    %v364 = vsub.f32 %v23, %v363
    %365 = vmatpush.msra.mxu0 %v364
    %v366 = vand.u32 %v160, 4294901760
    %v367 = vsub.f32 %v160, %v366
    %368 = vmatmul.f32.gmra.mxu0 %v367
    %v369 = vpop.f32.mrf.mxu0
    %v370 = vadd.f32 %v316, %v369
    %371 = vdwg.mxu0
    %v372 = vand.u32 %v38, 4294901760
    %373 = vmatpush.msra.mxu0 %v372
    %v374 = vand.u32 %v37, 4294901760
    %375 = vmatpush.msra.mxu0 %v374
    %v376 = vand.u32 %v36, 4294901760
    %377 = vmatpush.msra.mxu0 %v376
    %v378 = vand.u32 %v35, 4294901760
    %379 = vmatpush.msra.mxu0 %v378
    %v380 = vand.u32 %v34, 4294901760
    %381 = vmatpush.msra.mxu0 %v380
    %v382 = vand.u32 %v33, 4294901760
    %383 = vmatpush.msra.mxu0 %v382
    %v384 = vand.u32 %v32, 4294901760
    %385 = vmatpush.msra.mxu0 %v384
    %v386 = vand.u32 %v31, 4294901760
    %387 = vmatpush.msra.mxu0 %v386
    %v388 = vand.u32 %v30, 4294901760
    %389 = vmatpush.msra.mxu0 %v388
    %v390 = vand.u32 %v29, 4294901760
    %391 = vmatpush.msra.mxu0 %v390
    %v392 = vand.u32 %v28, 4294901760
    %393 = vmatpush.msra.mxu0 %v392
    %v394 = vand.u32 %v27, 4294901760
    %395 = vmatpush.msra.mxu0 %v394
    %v396 = vand.u32 %v26, 4294901760
    %397 = vmatpush.msra.mxu0 %v396
    %v398 = vand.u32 %v25, 4294901760
    %399 = vmatpush.msra.mxu0 %v398
    %v400 = vand.u32 %v24, 4294901760
    %401 = vmatpush.msra.mxu0 %v400
    %v402 = vand.u32 %v23, 4294901760
    %403 = vmatpush.msra.mxu0 %v402
    %v404 = vand.u32 %v160, 4294901760
    %v405 = vsub.f32 %v160, %v404
    %v406 = vand.u32 %v405, 4294901760
    %407 = vmatmul.f32.gmra.mxu0 %v406
    %v408 = vpop.f32.mrf.mxu0
    %v409 = vadd.f32 %v370, %v408
    %410 = vdwg.mxu0
    %v411 = vand.u32 %v38, 4294901760
    %v412 = vsub.f32 %v38, %v411
    %v413 = vand.u32 %v412, 4294901760
    %414 = vmatpush.msra.mxu0 %v413
    %v415 = vand.u32 %v37, 4294901760
    %v416 = vsub.f32 %v37, %v415
    %v417 = vand.u32 %v416, 4294901760
    %418 = vmatpush.msra.mxu0 %v417
    %v419 = vand.u32 %v36, 4294901760
    %v420 = vsub.f32 %v36, %v419
    %v421 = vand.u32 %v420, 4294901760
    %422 = vmatpush.msra.mxu0 %v421
    %v423 = vand.u32 %v35, 4294901760
    %v424 = vsub.f32 %v35, %v423
    %v425 = vand.u32 %v424, 4294901760
    %426 = vmatpush.msra.mxu0 %v425
    %v427 = vand.u32 %v34, 4294901760
    %v428 = vsub.f32 %v34, %v427
    %v429 = vand.u32 %v428, 4294901760
    %430 = vmatpush.msra.mxu0 %v429
    %v431 = vand.u32 %v33, 4294901760
    %v432 = vsub.f32 %v33, %v431
    %v433 = vand.u32 %v432, 4294901760
    %434 = vmatpush.msra.mxu0 %v433
    %v435 = vand.u32 %v32, 4294901760
    %v436 = vsub.f32 %v32, %v435
    %v437 = vand.u32 %v436, 4294901760
    %438 = vmatpush.msra.mxu0 %v437
    %v439 = vand.u32 %v31, 4294901760
    %v440 = vsub.f32 %v31, %v439
    %v441 = vand.u32 %v440, 4294901760
    %442 = vmatpush.msra.mxu0 %v441
    %v443 = vand.u32 %v30, 4294901760
    %v444 = vsub.f32 %v30, %v443
    %v445 = vand.u32 %v444, 4294901760
    %446 = vmatpush.msra.mxu0 %v445
    %v447 = vand.u32 %v29, 4294901760
    %v448 = vsub.f32 %v29, %v447
    %v449 = vand.u32 %v448, 4294901760
    %450 = vmatpush.msra.mxu0 %v449
    %v451 = vand.u32 %v28, 4294901760
    %v452 = vsub.f32 %v28, %v451
    %v453 = vand.u32 %v452, 4294901760
    %454 = vmatpush.msra.mxu0 %v453
    %v455 = vand.u32 %v27, 4294901760
    %v456 = vsub.f32 %v27, %v455
    %v457 = vand.u32 %v456, 4294901760
    %458 = vmatpush.msra.mxu0 %v457
    %v459 = vand.u32 %v26, 4294901760
    %v460 = vsub.f32 %v26, %v459
    %v461 = vand.u32 %v460, 4294901760
    %462 = vmatpush.msra.mxu0 %v461
    %v463 = vand.u32 %v25, 4294901760
    %v464 = vsub.f32 %v25, %v463
    %v465 = vand.u32 %v464, 4294901760
    %466 = vmatpush.msra.mxu0 %v465
    %v467 = vand.u32 %v24, 4294901760
    %v468 = vsub.f32 %v24, %v467
    %v469 = vand.u32 %v468, 4294901760
    %470 = vmatpush.msra.mxu0 %v469
    %v471 = vand.u32 %v23, 4294901760
    %v472 = vsub.f32 %v23, %v471
    %v473 = vand.u32 %v472, 4294901760
    %474 = vmatpush.msra.mxu0 %v473
    %v475 = vand.u32 %v160, 4294901760
    %476 = vmatmul.f32.gmra.mxu0 %v475
    %v477 = vpop.f32.mrf.mxu0
    %v478 = vadd.f32 %v409, %v477
    %479 = vdwg.mxu0
    %v480 = vand.u32 %v38, 4294901760
    %481 = vmatpush.msra.mxu0 %v480
    %v482 = vand.u32 %v37, 4294901760
    %483 = vmatpush.msra.mxu0 %v482
    %v484 = vand.u32 %v36, 4294901760
    %485 = vmatpush.msra.mxu0 %v484
    %v486 = vand.u32 %v35, 4294901760
    %487 = vmatpush.msra.mxu0 %v486
    %v488 = vand.u32 %v34, 4294901760
    %489 = vmatpush.msra.mxu0 %v488
    %v490 = vand.u32 %v33, 4294901760
    %491 = vmatpush.msra.mxu0 %v490
    %v492 = vand.u32 %v32, 4294901760
    %493 = vmatpush.msra.mxu0 %v492
    %v494 = vand.u32 %v31, 4294901760
    %495 = vmatpush.msra.mxu0 %v494
    %v496 = vand.u32 %v30, 4294901760
    %497 = vmatpush.msra.mxu0 %v496
    %v498 = vand.u32 %v29, 4294901760
    %499 = vmatpush.msra.mxu0 %v498
    %v500 = vand.u32 %v28, 4294901760
    %501 = vmatpush.msra.mxu0 %v500
    %v502 = vand.u32 %v27, 4294901760
    %503 = vmatpush.msra.mxu0 %v502
    %v504 = vand.u32 %v26, 4294901760
    %505 = vmatpush.msra.mxu0 %v504
    %v506 = vand.u32 %v25, 4294901760
    %507 = vmatpush.msra.mxu0 %v506
    %v508 = vand.u32 %v24, 4294901760
    %509 = vmatpush.msra.mxu0 %v508
    %v510 = vand.u32 %v23, 4294901760
    %511 = vmatpush.msra.mxu0 %v510
    %v512 = vand.u32 %v160, 4294901760
    %513 = vmatmul.f32.gmra.mxu0 %v512
    %v514 = vpop.f32.mrf.mxu0
    %v515 = vadd.f32 %v478, %v514
    %516 = vdwg.mxu0
    %v517 = vand.u32 %v54, 4294901760
    %518 = vmatpush.msra.mxu0 %v517
    %v519 = vand.u32 %v53, 4294901760
    %520 = vmatpush.msra.mxu0 %v519
    %v521 = vand.u32 %v52, 4294901760
    %522 = vmatpush.msra.mxu0 %v521
    %v523 = vand.u32 %v51, 4294901760
    %524 = vmatpush.msra.mxu0 %v523
    %v525 = vand.u32 %v50, 4294901760
    %526 = vmatpush.msra.mxu0 %v525
    %v527 = vand.u32 %v49, 4294901760
    %528 = vmatpush.msra.mxu0 %v527
    %v529 = vand.u32 %v48, 4294901760
    %530 = vmatpush.msra.mxu0 %v529
    %v531 = vand.u32 %v47, 4294901760
    %532 = vmatpush.msra.mxu0 %v531
    %v533 = vand.u32 %v46, 4294901760
    %534 = vmatpush.msra.mxu0 %v533
    %v535 = vand.u32 %v45, 4294901760
    %536 = vmatpush.msra.mxu0 %v535
    %v537 = vand.u32 %v44, 4294901760
    %538 = vmatpush.msra.mxu0 %v537
    %v539 = vand.u32 %v43, 4294901760
    %540 = vmatpush.msra.mxu0 %v539
    %v541 = vand.u32 %v42, 4294901760
    %542 = vmatpush.msra.mxu0 %v541
    %v543 = vand.u32 %v41, 4294901760
    %544 = vmatpush.msra.mxu0 %v543
    %v545 = vand.u32 %v40, 4294901760
    %546 = vmatpush.msra.mxu0 %v545
    %v547 = vand.u32 %v39, 4294901760
    %548 = vmatpush.msra.mxu0 %v547
    %v549 = vand.u32 %v161, 4294901760
    %v550 = vsub.f32 %v161, %v549
    %v551 = vand.u32 %v550, 4294901760
    %v552 = vsub.f32 %v550, %v551
    %v553 = vand.u32 %v552, 4294901760
    %554 = vmatmul.f32.gmra.mxu0 %v553
    %v555 = vpop.f32.mrf.mxu0
    %v556 = vadd.f32 %v515, %v555
    %557 = vdwg.mxu0
    %v558 = vand.u32 %v54, 4294901760
    %v559 = vsub.f32 %v54, %v558
    %v560 = vand.u32 %v559, 4294901760
    %v561 = vsub.f32 %v559, %v560
    %v562 = vand.u32 %v561, 4294901760
    %563 = vmatpush.msra.mxu0 %v562
    %v564 = vand.u32 %v53, 4294901760
    %v565 = vsub.f32 %v53, %v564
    %v566 = vand.u32 %v565, 4294901760
    %v567 = vsub.f32 %v565, %v566
    %v568 = vand.u32 %v567, 4294901760
    %569 = vmatpush.msra.mxu0 %v568
    %v570 = vand.u32 %v52, 4294901760
    %v571 = vsub.f32 %v52, %v570
    %v572 = vand.u32 %v571, 4294901760
    %v573 = vsub.f32 %v571, %v572
    %v574 = vand.u32 %v573, 4294901760
    %575 = vmatpush.msra.mxu0 %v574
    %v576 = vand.u32 %v51, 4294901760
    %v577 = vsub.f32 %v51, %v576
    %v578 = vand.u32 %v577, 4294901760
    %v579 = vsub.f32 %v577, %v578
    %v580 = vand.u32 %v579, 4294901760
    %581 = vmatpush.msra.mxu0 %v580
    %v582 = vand.u32 %v50, 4294901760
    %v583 = vsub.f32 %v50, %v582
    %v584 = vand.u32 %v583, 4294901760
    %v585 = vsub.f32 %v583, %v584
    %v586 = vand.u32 %v585, 4294901760
    %587 = vmatpush.msra.mxu0 %v586
    %v588 = vand.u32 %v49, 4294901760
    %v589 = vsub.f32 %v49, %v588
    %v590 = vand.u32 %v589, 4294901760
    %v591 = vsub.f32 %v589, %v590
    %v592 = vand.u32 %v591, 4294901760
    %593 = vmatpush.msra.mxu0 %v592
    %v594 = vand.u32 %v48, 4294901760
    %v595 = vsub.f32 %v48, %v594
    %v596 = vand.u32 %v595, 4294901760
    %v597 = vsub.f32 %v595, %v596
    %v598 = vand.u32 %v597, 4294901760
    %599 = vmatpush.msra.mxu0 %v598
    %v600 = vand.u32 %v47, 4294901760
    %v601 = vsub.f32 %v47, %v600
    %v602 = vand.u32 %v601, 4294901760
    %v603 = vsub.f32 %v601, %v602
    %v604 = vand.u32 %v603, 4294901760
    %605 = vmatpush.msra.mxu0 %v604
    %v606 = vand.u32 %v46, 4294901760
    %v607 = vsub.f32 %v46, %v606
    %v608 = vand.u32 %v607, 4294901760
    %v609 = vsub.f32 %v607, %v608
    %v610 = vand.u32 %v609, 4294901760
    %611 = vmatpush.msra.mxu0 %v610
    %v612 = vand.u32 %v45, 4294901760
    %v613 = vsub.f32 %v45, %v612
    %v614 = vand.u32 %v613, 4294901760
    %v615 = vsub.f32 %v613, %v614
    %v616 = vand.u32 %v615, 4294901760
    %617 = vmatpush.msra.mxu0 %v616
    %v618 = vand.u32 %v44, 4294901760
    %v619 = vsub.f32 %v44, %v618
    %v620 = vand.u32 %v619, 4294901760
    %v621 = vsub.f32 %v619, %v620
    %v622 = vand.u32 %v621, 4294901760
    %623 = vmatpush.msra.mxu0 %v622
    %v624 = vand.u32 %v43, 4294901760
    %v625 = vsub.f32 %v43, %v624
    %v626 = vand.u32 %v625, 4294901760
    %v627 = vsub.f32 %v625, %v626
    %v628 = vand.u32 %v627, 4294901760
    %629 = vmatpush.msra.mxu0 %v628
    %v630 = vand.u32 %v42, 4294901760
    %v631 = vsub.f32 %v42, %v630
    %v632 = vand.u32 %v631, 4294901760
    %v633 = vsub.f32 %v631, %v632
    %v634 = vand.u32 %v633, 4294901760
    %635 = vmatpush.msra.mxu0 %v634
    %v636 = vand.u32 %v41, 4294901760
    %v637 = vsub.f32 %v41, %v636
    %v638 = vand.u32 %v637, 4294901760
    %v639 = vsub.f32 %v637, %v638
    %v640 = vand.u32 %v639, 4294901760
    %641 = vmatpush.msra.mxu0 %v640
    %v642 = vand.u32 %v40, 4294901760
    %v643 = vsub.f32 %v40, %v642
    %v644 = vand.u32 %v643, 4294901760
    %v645 = vsub.f32 %v643, %v644
    %v646 = vand.u32 %v645, 4294901760
    %647 = vmatpush.msra.mxu0 %v646
    %v648 = vand.u32 %v39, 4294901760
    %v649 = vsub.f32 %v39, %v648
    %v650 = vand.u32 %v649, 4294901760
    %v651 = vsub.f32 %v649, %v650
    %v652 = vand.u32 %v651, 4294901760
    %653 = vmatpush.msra.mxu0 %v652
    %v654 = vand.u32 %v161, 4294901760
    %655 = vmatmul.f32.gmra.mxu0 %v654
    %v656 = vpop.f32.mrf.mxu0
    %v657 = vadd.f32 %v556, %v656
    %658 = vdwg.mxu0
    %v659 = vand.u32 %v54, 4294901760
    %v660 = vsub.f32 %v54, %v659
    %661 = vmatpush.msra.mxu0 %v660
    %v662 = vand.u32 %v53, 4294901760
    %v663 = vsub.f32 %v53, %v662
    %664 = vmatpush.msra.mxu0 %v663
    %v665 = vand.u32 %v52, 4294901760
    %v666 = vsub.f32 %v52, %v665
    %667 = vmatpush.msra.mxu0 %v666
    %v668 = vand.u32 %v51, 4294901760
    %v669 = vsub.f32 %v51, %v668
    %670 = vmatpush.msra.mxu0 %v669
    %v671 = vand.u32 %v50, 4294901760
    %v672 = vsub.f32 %v50, %v671
    %673 = vmatpush.msra.mxu0 %v672
    %v674 = vand.u32 %v49, 4294901760
    %v675 = vsub.f32 %v49, %v674
    %676 = vmatpush.msra.mxu0 %v675
    %v677 = vand.u32 %v48, 4294901760
    %v678 = vsub.f32 %v48, %v677
    %679 = vmatpush.msra.mxu0 %v678
    %v680 = vand.u32 %v47, 4294901760
    %v681 = vsub.f32 %v47, %v680
    %682 = vmatpush.msra.mxu0 %v681
    %v683 = vand.u32 %v46, 4294901760
    %v684 = vsub.f32 %v46, %v683
    %685 = vmatpush.msra.mxu0 %v684
    %v686 = vand.u32 %v45, 4294901760
    %v687 = vsub.f32 %v45, %v686
    %688 = vmatpush.msra.mxu0 %v687
    %v689 = vand.u32 %v44, 4294901760
    %v690 = vsub.f32 %v44, %v689
    %691 = vmatpush.msra.mxu0 %v690
    %v692 = vand.u32 %v43, 4294901760
    %v693 = vsub.f32 %v43, %v692
    %694 = vmatpush.msra.mxu0 %v693
    %v695 = vand.u32 %v42, 4294901760
    %v696 = vsub.f32 %v42, %v695
    %697 = vmatpush.msra.mxu0 %v696
    %v698 = vand.u32 %v41, 4294901760
    %v699 = vsub.f32 %v41, %v698
    %700 = vmatpush.msra.mxu0 %v699
    %v701 = vand.u32 %v40, 4294901760
    %v702 = vsub.f32 %v40, %v701
    %703 = vmatpush.msra.mxu0 %v702
    %v704 = vand.u32 %v39, 4294901760
    %v705 = vsub.f32 %v39, %v704
    %706 = vmatpush.msra.mxu0 %v705
    %v707 = vand.u32 %v161, 4294901760
    %v708 = vsub.f32 %v161, %v707
    %709 = vmatmul.f32.gmra.mxu0 %v708
    %v710 = vpop.f32.mrf.mxu0
    %v711 = vadd.f32 %v657, %v710
    %712 = vdwg.mxu0
    %v713 = vand.u32 %v54, 4294901760
    %714 = vmatpush.msra.mxu0 %v713
    %v715 = vand.u32 %v53, 4294901760
    %716 = vmatpush.msra.mxu0 %v715
    %v717 = vand.u32 %v52, 4294901760
    %718 = vmatpush.msra.mxu0 %v717
    %v719 = vand.u32 %v51, 4294901760
    %720 = vmatpush.msra.mxu0 %v719
    %v721 = vand.u32 %v50, 4294901760
    %722 = vmatpush.msra.mxu0 %v721
    %v723 = vand.u32 %v49, 4294901760
    %724 = vmatpush.msra.mxu0 %v723
    %v725 = vand.u32 %v48, 4294901760
    %726 = vmatpush.msra.mxu0 %v725
    %v727 = vand.u32 %v47, 4294901760
    %728 = vmatpush.msra.mxu0 %v727
    %v729 = vand.u32 %v46, 4294901760
    %730 = vmatpush.msra.mxu0 %v729
    %v731 = vand.u32 %v45, 4294901760
    %732 = vmatpush.msra.mxu0 %v731
    %v733 = vand.u32 %v44, 4294901760
    %734 = vmatpush.msra.mxu0 %v733
    %v735 = vand.u32 %v43, 4294901760
    %736 = vmatpush.msra.mxu0 %v735
    %v737 = vand.u32 %v42, 4294901760
    %738 = vmatpush.msra.mxu0 %v737
    %v739 = vand.u32 %v41, 4294901760
    %740 = vmatpush.msra.mxu0 %v739
    %v741 = vand.u32 %v40, 4294901760
    %742 = vmatpush.msra.mxu0 %v741
    %v743 = vand.u32 %v39, 4294901760
    %744 = vmatpush.msra.mxu0 %v743
    %v745 = vand.u32 %v161, 4294901760
    %v746 = vsub.f32 %v161, %v745
    %v747 = vand.u32 %v746, 4294901760
    %748 = vmatmul.f32.gmra.mxu0 %v747
    %v749 = vpop.f32.mrf.mxu0
    %v750 = vadd.f32 %v711, %v749
    %751 = vdwg.mxu0
    %v752 = vand.u32 %v54, 4294901760
    %v753 = vsub.f32 %v54, %v752
    %v754 = vand.u32 %v753, 4294901760
    %755 = vmatpush.msra.mxu0 %v754
    %v756 = vand.u32 %v53, 4294901760
    %v757 = vsub.f32 %v53, %v756
    %v758 = vand.u32 %v757, 4294901760
    %759 = vmatpush.msra.mxu0 %v758
    %v760 = vand.u32 %v52, 4294901760
    %v761 = vsub.f32 %v52, %v760
    %v762 = vand.u32 %v761, 4294901760
    %763 = vmatpush.msra.mxu0 %v762
    %v764 = vand.u32 %v51, 4294901760
    %v765 = vsub.f32 %v51, %v764
    %v766 = vand.u32 %v765, 4294901760
    %767 = vmatpush.msra.mxu0 %v766
    %v768 = vand.u32 %v50, 4294901760
    %v769 = vsub.f32 %v50, %v768
    %v770 = vand.u32 %v769, 4294901760
    %771 = vmatpush.msra.mxu0 %v770
    %v772 = vand.u32 %v49, 4294901760
    %v773 = vsub.f32 %v49, %v772
    %v774 = vand.u32 %v773, 4294901760
    %775 = vmatpush.msra.mxu0 %v774
    %v776 = vand.u32 %v48, 4294901760
    %v777 = vsub.f32 %v48, %v776
    %v778 = vand.u32 %v777, 4294901760
    %779 = vmatpush.msra.mxu0 %v778
    %v780 = vand.u32 %v47, 4294901760
    %v781 = vsub.f32 %v47, %v780
    %v782 = vand.u32 %v781, 4294901760
    %783 = vmatpush.msra.mxu0 %v782
    %v784 = vand.u32 %v46, 4294901760
    %v785 = vsub.f32 %v46, %v784
    %v786 = vand.u32 %v785, 4294901760
    %787 = vmatpush.msra.mxu0 %v786
    %v788 = vand.u32 %v45, 4294901760
    %v789 = vsub.f32 %v45, %v788
    %v790 = vand.u32 %v789, 4294901760
    %791 = vmatpush.msra.mxu0 %v790
    %v792 = vand.u32 %v44, 4294901760
    %v793 = vsub.f32 %v44, %v792
    %v794 = vand.u32 %v793, 4294901760
    %795 = vmatpush.msra.mxu0 %v794
    %v796 = vand.u32 %v43, 4294901760
    %v797 = vsub.f32 %v43, %v796
    %v798 = vand.u32 %v797, 4294901760
    %799 = vmatpush.msra.mxu0 %v798
    %v800 = vand.u32 %v42, 4294901760
    %v801 = vsub.f32 %v42, %v800
    %v802 = vand.u32 %v801, 4294901760
    %803 = vmatpush.msra.mxu0 %v802
    %v804 = vand.u32 %v41, 4294901760
    %v805 = vsub.f32 %v41, %v804
    %v806 = vand.u32 %v805, 4294901760
    %807 = vmatpush.msra.mxu0 %v806
    %v808 = vand.u32 %v40, 4294901760
    %v809 = vsub.f32 %v40, %v808
    %v810 = vand.u32 %v809, 4294901760
    %811 = vmatpush.msra.mxu0 %v810
    %v812 = vand.u32 %v39, 4294901760
    %v813 = vsub.f32 %v39, %v812
    %v814 = vand.u32 %v813, 4294901760
    %815 = vmatpush.msra.mxu0 %v814
    %v816 = vand.u32 %v161, 4294901760
    %817 = vmatmul.f32.gmra.mxu0 %v816
    %v818 = vpop.f32.mrf.mxu0
    %v819 = vadd.f32 %v750, %v818
    %820 = vdwg.mxu0
    %v821 = vand.u32 %v54, 4294901760
    %822 = vmatpush.msra.mxu0 %v821
    %v823 = vand.u32 %v53, 4294901760
    %824 = vmatpush.msra.mxu0 %v823
    %v825 = vand.u32 %v52, 4294901760
    %826 = vmatpush.msra.mxu0 %v825
    %v827 = vand.u32 %v51, 4294901760
    %828 = vmatpush.msra.mxu0 %v827
    %v829 = vand.u32 %v50, 4294901760
    %830 = vmatpush.msra.mxu0 %v829
    %v831 = vand.u32 %v49, 4294901760
    %832 = vmatpush.msra.mxu0 %v831
    %v833 = vand.u32 %v48, 4294901760
    %834 = vmatpush.msra.mxu0 %v833
    %v835 = vand.u32 %v47, 4294901760
    %836 = vmatpush.msra.mxu0 %v835
    %v837 = vand.u32 %v46, 4294901760
    %838 = vmatpush.msra.mxu0 %v837
    %v839 = vand.u32 %v45, 4294901760
    %840 = vmatpush.msra.mxu0 %v839
    %v841 = vand.u32 %v44, 4294901760
    %842 = vmatpush.msra.mxu0 %v841
    %v843 = vand.u32 %v43, 4294901760
    %844 = vmatpush.msra.mxu0 %v843
    %v845 = vand.u32 %v42, 4294901760
    %846 = vmatpush.msra.mxu0 %v845
    %v847 = vand.u32 %v41, 4294901760
    %848 = vmatpush.msra.mxu0 %v847
    %v849 = vand.u32 %v40, 4294901760
    %850 = vmatpush.msra.mxu0 %v849
    %v851 = vand.u32 %v39, 4294901760
    %852 = vmatpush.msra.mxu0 %v851
    %v853 = vand.u32 %v161, 4294901760
    %854 = vmatmul.f32.gmra.mxu0 %v853
    %v855 = vpop.f32.mrf.mxu0
    %v856 = vadd.f32 %v819, %v855
    %857 = vdwg.mxu0
    %v858 = vand.u32 %v70, 4294901760
    %859 = vmatpush.msra.mxu0 %v858
    %v860 = vand.u32 %v69, 4294901760
    %861 = vmatpush.msra.mxu0 %v860
    %v862 = vand.u32 %v68, 4294901760
    %863 = vmatpush.msra.mxu0 %v862
    %v864 = vand.u32 %v67, 4294901760
    %865 = vmatpush.msra.mxu0 %v864
    %v866 = vand.u32 %v66, 4294901760
    %867 = vmatpush.msra.mxu0 %v866
    %v868 = vand.u32 %v65, 4294901760
    %869 = vmatpush.msra.mxu0 %v868
    %v870 = vand.u32 %v64, 4294901760
    %871 = vmatpush.msra.mxu0 %v870
    %v872 = vand.u32 %v63, 4294901760
    %873 = vmatpush.msra.mxu0 %v872
    %v874 = vand.u32 %v62, 4294901760
    %875 = vmatpush.msra.mxu0 %v874
    %v876 = vand.u32 %v61, 4294901760
    %877 = vmatpush.msra.mxu0 %v876
    %v878 = vand.u32 %v60, 4294901760
    %879 = vmatpush.msra.mxu0 %v878
    %v880 = vand.u32 %v59, 4294901760
    %881 = vmatpush.msra.mxu0 %v880
    %v882 = vand.u32 %v58, 4294901760
    %883 = vmatpush.msra.mxu0 %v882
    %v884 = vand.u32 %v57, 4294901760
    %885 = vmatpush.msra.mxu0 %v884
    %v886 = vand.u32 %v56, 4294901760
    %887 = vmatpush.msra.mxu0 %v886
    %v888 = vand.u32 %v55, 4294901760
    %889 = vmatpush.msra.mxu0 %v888
    %v890 = vand.u32 %v162, 4294901760
    %v891 = vsub.f32 %v162, %v890
    %v892 = vand.u32 %v891, 4294901760
    %v893 = vsub.f32 %v891, %v892
    %v894 = vand.u32 %v893, 4294901760
    %895 = vmatmul.f32.gmra.mxu0 %v894
    %v896 = vpop.f32.mrf.mxu0
    %v897 = vadd.f32 %v856, %v896
    %898 = vdwg.mxu0
    %v899 = vand.u32 %v70, 4294901760
    %v900 = vsub.f32 %v70, %v899
    %v901 = vand.u32 %v900, 4294901760
    %v902 = vsub.f32 %v900, %v901
    %v903 = vand.u32 %v902, 4294901760
    %904 = vmatpush.msra.mxu0 %v903
    %v905 = vand.u32 %v69, 4294901760
    %v906 = vsub.f32 %v69, %v905
    %v907 = vand.u32 %v906, 4294901760
    %v908 = vsub.f32 %v906, %v907
    %v909 = vand.u32 %v908, 4294901760
    %910 = vmatpush.msra.mxu0 %v909
    %v911 = vand.u32 %v68, 4294901760
    %v912 = vsub.f32 %v68, %v911
    %v913 = vand.u32 %v912, 4294901760
    %v914 = vsub.f32 %v912, %v913
    %v915 = vand.u32 %v914, 4294901760
    %916 = vmatpush.msra.mxu0 %v915
    %v917 = vand.u32 %v67, 4294901760
    %v918 = vsub.f32 %v67, %v917
    %v919 = vand.u32 %v918, 4294901760
    %v920 = vsub.f32 %v918, %v919
    %v921 = vand.u32 %v920, 4294901760
    %922 = vmatpush.msra.mxu0 %v921
    %v923 = vand.u32 %v66, 4294901760
    %v924 = vsub.f32 %v66, %v923
    %v925 = vand.u32 %v924, 4294901760
    %v926 = vsub.f32 %v924, %v925
    %v927 = vand.u32 %v926, 4294901760
    %928 = vmatpush.msra.mxu0 %v927
    %v929 = vand.u32 %v65, 4294901760
    %v930 = vsub.f32 %v65, %v929
    %v931 = vand.u32 %v930, 4294901760
    %v932 = vsub.f32 %v930, %v931
    %v933 = vand.u32 %v932, 4294901760
    %934 = vmatpush.msra.mxu0 %v933
    %v935 = vand.u32 %v64, 4294901760
    %v936 = vsub.f32 %v64, %v935
    %v937 = vand.u32 %v936, 4294901760
    %v938 = vsub.f32 %v936, %v937
    %v939 = vand.u32 %v938, 4294901760
    %940 = vmatpush.msra.mxu0 %v939
    %v941 = vand.u32 %v63, 4294901760
    %v942 = vsub.f32 %v63, %v941
    %v943 = vand.u32 %v942, 4294901760
    %v944 = vsub.f32 %v942, %v943
    %v945 = vand.u32 %v944, 4294901760
    %946 = vmatpush.msra.mxu0 %v945
    %v947 = vand.u32 %v62, 4294901760
    %v948 = vsub.f32 %v62, %v947
    %v949 = vand.u32 %v948, 4294901760
    %v950 = vsub.f32 %v948, %v949
    %v951 = vand.u32 %v950, 4294901760
    %952 = vmatpush.msra.mxu0 %v951
    %v953 = vand.u32 %v61, 4294901760
    %v954 = vsub.f32 %v61, %v953
    %v955 = vand.u32 %v954, 4294901760
    %v956 = vsub.f32 %v954, %v955
    %v957 = vand.u32 %v956, 4294901760
    %958 = vmatpush.msra.mxu0 %v957
    %v959 = vand.u32 %v60, 4294901760
    %v960 = vsub.f32 %v60, %v959
    %v961 = vand.u32 %v960, 4294901760
    %v962 = vsub.f32 %v960, %v961
    %v963 = vand.u32 %v962, 4294901760
    %964 = vmatpush.msra.mxu0 %v963
    %v965 = vand.u32 %v59, 4294901760
    %v966 = vsub.f32 %v59, %v965
    %v967 = vand.u32 %v966, 4294901760
    %v968 = vsub.f32 %v966, %v967
    %v969 = vand.u32 %v968, 4294901760
    %970 = vmatpush.msra.mxu0 %v969
    %v971 = vand.u32 %v58, 4294901760
    %v972 = vsub.f32 %v58, %v971
    %v973 = vand.u32 %v972, 4294901760
    %v974 = vsub.f32 %v972, %v973
    %v975 = vand.u32 %v974, 4294901760
    %976 = vmatpush.msra.mxu0 %v975
    %v977 = vand.u32 %v57, 4294901760
    %v978 = vsub.f32 %v57, %v977
    %v979 = vand.u32 %v978, 4294901760
    %v980 = vsub.f32 %v978, %v979
    %v981 = vand.u32 %v980, 4294901760
    %982 = vmatpush.msra.mxu0 %v981
    %v983 = vand.u32 %v56, 4294901760
    %v984 = vsub.f32 %v56, %v983
    %v985 = vand.u32 %v984, 4294901760
    %v986 = vsub.f32 %v984, %v985
    %v987 = vand.u32 %v986, 4294901760
    %988 = vmatpush.msra.mxu0 %v987
    %v989 = vand.u32 %v55, 4294901760
    %v990 = vsub.f32 %v55, %v989
    %v991 = vand.u32 %v990, 4294901760
    %v992 = vsub.f32 %v990, %v991
    %v993 = vand.u32 %v992, 4294901760
    %994 = vmatpush.msra.mxu0 %v993
    %v995 = vand.u32 %v162, 4294901760
    %996 = vmatmul.f32.gmra.mxu0 %v995
    %v997 = vpop.f32.mrf.mxu0
    %v998 = vadd.f32 %v897, %v997
    %999 = vdwg.mxu0
    %v1000 = vand.u32 %v70, 4294901760
    %v1001 = vsub.f32 %v70, %v1000
    %1002 = vmatpush.msra.mxu0 %v1001
    %v1003 = vand.u32 %v69, 4294901760
    %v1004 = vsub.f32 %v69, %v1003
    %1005 = vmatpush.msra.mxu0 %v1004
    %v1006 = vand.u32 %v68, 4294901760
    %v1007 = vsub.f32 %v68, %v1006
    %1008 = vmatpush.msra.mxu0 %v1007
    %v1009 = vand.u32 %v67, 4294901760
    %v1010 = vsub.f32 %v67, %v1009
    %1011 = vmatpush.msra.mxu0 %v1010
    %v1012 = vand.u32 %v66, 4294901760
    %v1013 = vsub.f32 %v66, %v1012
    %1014 = vmatpush.msra.mxu0 %v1013
    %v1015 = vand.u32 %v65, 4294901760
    %v1016 = vsub.f32 %v65, %v1015
    %1017 = vmatpush.msra.mxu0 %v1016
    %v1018 = vand.u32 %v64, 4294901760
    %v1019 = vsub.f32 %v64, %v1018
    %1020 = vmatpush.msra.mxu0 %v1019
    %v1021 = vand.u32 %v63, 4294901760
    %v1022 = vsub.f32 %v63, %v1021
    %1023 = vmatpush.msra.mxu0 %v1022
    %v1024 = vand.u32 %v62, 4294901760
    %v1025 = vsub.f32 %v62, %v1024
    %1026 = vmatpush.msra.mxu0 %v1025
    %v1027 = vand.u32 %v61, 4294901760
    %v1028 = vsub.f32 %v61, %v1027
    %1029 = vmatpush.msra.mxu0 %v1028
    %v1030 = vand.u32 %v60, 4294901760
    %v1031 = vsub.f32 %v60, %v1030
    %1032 = vmatpush.msra.mxu0 %v1031
    %v1033 = vand.u32 %v59, 4294901760
    %v1034 = vsub.f32 %v59, %v1033
    %1035 = vmatpush.msra.mxu0 %v1034
    %v1036 = vand.u32 %v58, 4294901760
    %v1037 = vsub.f32 %v58, %v1036
    %1038 = vmatpush.msra.mxu0 %v1037
    %v1039 = vand.u32 %v57, 4294901760
    %v1040 = vsub.f32 %v57, %v1039
    %1041 = vmatpush.msra.mxu0 %v1040
    %v1042 = vand.u32 %v56, 4294901760
    %v1043 = vsub.f32 %v56, %v1042
    %1044 = vmatpush.msra.mxu0 %v1043
    %v1045 = vand.u32 %v55, 4294901760
    %v1046 = vsub.f32 %v55, %v1045
    %1047 = vmatpush.msra.mxu0 %v1046
    %v1048 = vand.u32 %v162, 4294901760
    %v1049 = vsub.f32 %v162, %v1048
    %1050 = vmatmul.f32.gmra.mxu0 %v1049
    %v1051 = vpop.f32.mrf.mxu0
    %v1052 = vadd.f32 %v998, %v1051
    %1053 = vdwg.mxu0
    %v1054 = vand.u32 %v70, 4294901760
    %1055 = vmatpush.msra.mxu0 %v1054
    %v1056 = vand.u32 %v69, 4294901760
    %1057 = vmatpush.msra.mxu0 %v1056
    %v1058 = vand.u32 %v68, 4294901760
    %1059 = vmatpush.msra.mxu0 %v1058
    %v1060 = vand.u32 %v67, 4294901760
    %1061 = vmatpush.msra.mxu0 %v1060
    %v1062 = vand.u32 %v66, 4294901760
    %1063 = vmatpush.msra.mxu0 %v1062
    %v1064 = vand.u32 %v65, 4294901760
    %1065 = vmatpush.msra.mxu0 %v1064
    %v1066 = vand.u32 %v64, 4294901760
    %1067 = vmatpush.msra.mxu0 %v1066
    %v1068 = vand.u32 %v63, 4294901760
    %1069 = vmatpush.msra.mxu0 %v1068
    %v1070 = vand.u32 %v62, 4294901760
    %1071 = vmatpush.msra.mxu0 %v1070
    %v1072 = vand.u32 %v61, 4294901760
    %1073 = vmatpush.msra.mxu0 %v1072
    %v1074 = vand.u32 %v60, 4294901760
    %1075 = vmatpush.msra.mxu0 %v1074
    %v1076 = vand.u32 %v59, 4294901760
    %1077 = vmatpush.msra.mxu0 %v1076
    %v1078 = vand.u32 %v58, 4294901760
    %1079 = vmatpush.msra.mxu0 %v1078
    %v1080 = vand.u32 %v57, 4294901760
    %1081 = vmatpush.msra.mxu0 %v1080
    %v1082 = vand.u32 %v56, 4294901760
    %1083 = vmatpush.msra.mxu0 %v1082
    %v1084 = vand.u32 %v55, 4294901760
    %1085 = vmatpush.msra.mxu0 %v1084
    %v1086 = vand.u32 %v162, 4294901760
    %v1087 = vsub.f32 %v162, %v1086
    %v1088 = vand.u32 %v1087, 4294901760
    %1089 = vmatmul.f32.gmra.mxu0 %v1088
    %v1090 = vpop.f32.mrf.mxu0
    %v1091 = vadd.f32 %v1052, %v1090
    %1092 = vdwg.mxu0
    %v1093 = vand.u32 %v70, 4294901760
    %v1094 = vsub.f32 %v70, %v1093
    %v1095 = vand.u32 %v1094, 4294901760
    %1096 = vmatpush.msra.mxu0 %v1095
    %v1097 = vand.u32 %v69, 4294901760
    %v1098 = vsub.f32 %v69, %v1097
    %v1099 = vand.u32 %v1098, 4294901760
    %1100 = vmatpush.msra.mxu0 %v1099
    %v1101 = vand.u32 %v68, 4294901760
    %v1102 = vsub.f32 %v68, %v1101
    %v1103 = vand.u32 %v1102, 4294901760
    %1104 = vmatpush.msra.mxu0 %v1103
    %v1105 = vand.u32 %v67, 4294901760
    %v1106 = vsub.f32 %v67, %v1105
    %v1107 = vand.u32 %v1106, 4294901760
    %1108 = vmatpush.msra.mxu0 %v1107
    %v1109 = vand.u32 %v66, 4294901760
    %v1110 = vsub.f32 %v66, %v1109
    %v1111 = vand.u32 %v1110, 4294901760
    %1112 = vmatpush.msra.mxu0 %v1111
    %v1113 = vand.u32 %v65, 4294901760
    %v1114 = vsub.f32 %v65, %v1113
    %v1115 = vand.u32 %v1114, 4294901760
    %1116 = vmatpush.msra.mxu0 %v1115
    %v1117 = vand.u32 %v64, 4294901760
    %v1118 = vsub.f32 %v64, %v1117
    %v1119 = vand.u32 %v1118, 4294901760
    %1120 = vmatpush.msra.mxu0 %v1119
    %v1121 = vand.u32 %v63, 4294901760
    %v1122 = vsub.f32 %v63, %v1121
    %v1123 = vand.u32 %v1122, 4294901760
    %1124 = vmatpush.msra.mxu0 %v1123
    %v1125 = vand.u32 %v62, 4294901760
    %v1126 = vsub.f32 %v62, %v1125
    %v1127 = vand.u32 %v1126, 4294901760
    %1128 = vmatpush.msra.mxu0 %v1127
    %v1129 = vand.u32 %v61, 4294901760
    %v1130 = vsub.f32 %v61, %v1129
    %v1131 = vand.u32 %v1130, 4294901760
    %1132 = vmatpush.msra.mxu0 %v1131
    %v1133 = vand.u32 %v60, 4294901760
    %v1134 = vsub.f32 %v60, %v1133
    %v1135 = vand.u32 %v1134, 4294901760
    %1136 = vmatpush.msra.mxu0 %v1135
    %v1137 = vand.u32 %v59, 4294901760
    %v1138 = vsub.f32 %v59, %v1137
    %v1139 = vand.u32 %v1138, 4294901760
    %1140 = vmatpush.msra.mxu0 %v1139
    %v1141 = vand.u32 %v58, 4294901760
    %v1142 = vsub.f32 %v58, %v1141
    %v1143 = vand.u32 %v1142, 4294901760
    %1144 = vmatpush.msra.mxu0 %v1143
    %v1145 = vand.u32 %v57, 4294901760
    %v1146 = vsub.f32 %v57, %v1145
    %v1147 = vand.u32 %v1146, 4294901760
    %1148 = vmatpush.msra.mxu0 %v1147
    %v1149 = vand.u32 %v56, 4294901760
    %v1150 = vsub.f32 %v56, %v1149
    %v1151 = vand.u32 %v1150, 4294901760
    %1152 = vmatpush.msra.mxu0 %v1151
    %v1153 = vand.u32 %v55, 4294901760
    %v1154 = vsub.f32 %v55, %v1153
    %v1155 = vand.u32 %v1154, 4294901760
    %1156 = vmatpush.msra.mxu0 %v1155
    %v1157 = vand.u32 %v162, 4294901760
    %1158 = vmatmul.f32.gmra.mxu0 %v1157
    %v1159 = vpop.f32.mrf.mxu0
    %v1160 = vadd.f32 %v1091, %v1159
    %1161 = vdwg.mxu0
    %v1162 = vand.u32 %v70, 4294901760
    %1163 = vmatpush.msra.mxu0 %v1162
    %v1164 = vand.u32 %v69, 4294901760
    %1165 = vmatpush.msra.mxu0 %v1164
    %v1166 = vand.u32 %v68, 4294901760
    %1167 = vmatpush.msra.mxu0 %v1166
    %v1168 = vand.u32 %v67, 4294901760
    %1169 = vmatpush.msra.mxu0 %v1168
    %v1170 = vand.u32 %v66, 4294901760
    %1171 = vmatpush.msra.mxu0 %v1170
    %v1172 = vand.u32 %v65, 4294901760
    %1173 = vmatpush.msra.mxu0 %v1172
    %v1174 = vand.u32 %v64, 4294901760
    %1175 = vmatpush.msra.mxu0 %v1174
    %v1176 = vand.u32 %v63, 4294901760
    %1177 = vmatpush.msra.mxu0 %v1176
    %v1178 = vand.u32 %v62, 4294901760
    %1179 = vmatpush.msra.mxu0 %v1178
    %v1180 = vand.u32 %v61, 4294901760
    %1181 = vmatpush.msra.mxu0 %v1180
    %v1182 = vand.u32 %v60, 4294901760
    %1183 = vmatpush.msra.mxu0 %v1182
    %v1184 = vand.u32 %v59, 4294901760
    %1185 = vmatpush.msra.mxu0 %v1184
    %v1186 = vand.u32 %v58, 4294901760
    %1187 = vmatpush.msra.mxu0 %v1186
    %v1188 = vand.u32 %v57, 4294901760
    %1189 = vmatpush.msra.mxu0 %v1188
    %v1190 = vand.u32 %v56, 4294901760
    %1191 = vmatpush.msra.mxu0 %v1190
    %v1192 = vand.u32 %v55, 4294901760
    %1193 = vmatpush.msra.mxu0 %v1192
    %v1194 = vand.u32 %v162, 4294901760
    %1195 = vmatmul.f32.gmra.mxu0 %v1194
    %v1196 = vpop.f32.mrf.mxu0
    %v1197 = vadd.f32 %v1160, %v1196
    %1198 = vdwg.mxu0
    %v1199 = vand.u32 %v86, 4294901760
    %1200 = vmatpush.msra.mxu0 %v1199
    %v1201 = vand.u32 %v85, 4294901760
    %1202 = vmatpush.msra.mxu0 %v1201
    %v1203 = vand.u32 %v84, 4294901760
    %1204 = vmatpush.msra.mxu0 %v1203
    %v1205 = vand.u32 %v83, 4294901760
    %1206 = vmatpush.msra.mxu0 %v1205
    %v1207 = vand.u32 %v82, 4294901760
    %1208 = vmatpush.msra.mxu0 %v1207
    %v1209 = vand.u32 %v81, 4294901760
    %1210 = vmatpush.msra.mxu0 %v1209
    %v1211 = vand.u32 %v80, 4294901760
    %1212 = vmatpush.msra.mxu0 %v1211
    %v1213 = vand.u32 %v79, 4294901760
    %1214 = vmatpush.msra.mxu0 %v1213
    %v1215 = vand.u32 %v78, 4294901760
    %1216 = vmatpush.msra.mxu0 %v1215
    %v1217 = vand.u32 %v77, 4294901760
    %1218 = vmatpush.msra.mxu0 %v1217
    %v1219 = vand.u32 %v76, 4294901760
    %1220 = vmatpush.msra.mxu0 %v1219
    %v1221 = vand.u32 %v75, 4294901760
    %1222 = vmatpush.msra.mxu0 %v1221
    %v1223 = vand.u32 %v74, 4294901760
    %1224 = vmatpush.msra.mxu0 %v1223
    %v1225 = vand.u32 %v73, 4294901760
    %1226 = vmatpush.msra.mxu0 %v1225
    %v1227 = vand.u32 %v72, 4294901760
    %1228 = vmatpush.msra.mxu0 %v1227
    %v1229 = vand.u32 %v71, 4294901760
    %1230 = vmatpush.msra.mxu0 %v1229
    %v1231 = vand.u32 %v163, 4294901760
    %v1232 = vsub.f32 %v163, %v1231
    %v1233 = vand.u32 %v1232, 4294901760
    %v1234 = vsub.f32 %v1232, %v1233
    %v1235 = vand.u32 %v1234, 4294901760
    %1236 = vmatmul.f32.gmra.mxu0 %v1235
    %v1237 = vpop.f32.mrf.mxu0
    %v1238 = vadd.f32 %v1197, %v1237
    %1239 = vdwg.mxu0
    %v1240 = vand.u32 %v86, 4294901760
    %v1241 = vsub.f32 %v86, %v1240
    %v1242 = vand.u32 %v1241, 4294901760
    %v1243 = vsub.f32 %v1241, %v1242
    %v1244 = vand.u32 %v1243, 4294901760
    %1245 = vmatpush.msra.mxu0 %v1244
    %v1246 = vand.u32 %v85, 4294901760
    %v1247 = vsub.f32 %v85, %v1246
    %v1248 = vand.u32 %v1247, 4294901760
    %v1249 = vsub.f32 %v1247, %v1248
    %v1250 = vand.u32 %v1249, 4294901760
    %1251 = vmatpush.msra.mxu0 %v1250
    %v1252 = vand.u32 %v84, 4294901760
    %v1253 = vsub.f32 %v84, %v1252
    %v1254 = vand.u32 %v1253, 4294901760
    %v1255 = vsub.f32 %v1253, %v1254
    %v1256 = vand.u32 %v1255, 4294901760
    %1257 = vmatpush.msra.mxu0 %v1256
    %v1258 = vand.u32 %v83, 4294901760
    %v1259 = vsub.f32 %v83, %v1258
    %v1260 = vand.u32 %v1259, 4294901760
    %v1261 = vsub.f32 %v1259, %v1260
    %v1262 = vand.u32 %v1261, 4294901760
    %1263 = vmatpush.msra.mxu0 %v1262
    %v1264 = vand.u32 %v82, 4294901760
    %v1265 = vsub.f32 %v82, %v1264
    %v1266 = vand.u32 %v1265, 4294901760
    %v1267 = vsub.f32 %v1265, %v1266
    %v1268 = vand.u32 %v1267, 4294901760
    %1269 = vmatpush.msra.mxu0 %v1268
    %v1270 = vand.u32 %v81, 4294901760
    %v1271 = vsub.f32 %v81, %v1270
    %v1272 = vand.u32 %v1271, 4294901760
    %v1273 = vsub.f32 %v1271, %v1272
    %v1274 = vand.u32 %v1273, 4294901760
    %1275 = vmatpush.msra.mxu0 %v1274
    %v1276 = vand.u32 %v80, 4294901760
    %v1277 = vsub.f32 %v80, %v1276
    %v1278 = vand.u32 %v1277, 4294901760
    %v1279 = vsub.f32 %v1277, %v1278
    %v1280 = vand.u32 %v1279, 4294901760
    %1281 = vmatpush.msra.mxu0 %v1280
    %v1282 = vand.u32 %v79, 4294901760
    %v1283 = vsub.f32 %v79, %v1282
    %v1284 = vand.u32 %v1283, 4294901760
    %v1285 = vsub.f32 %v1283, %v1284
    %v1286 = vand.u32 %v1285, 4294901760
    %1287 = vmatpush.msra.mxu0 %v1286
    %v1288 = vand.u32 %v78, 4294901760
    %v1289 = vsub.f32 %v78, %v1288
    %v1290 = vand.u32 %v1289, 4294901760
    %v1291 = vsub.f32 %v1289, %v1290
    %v1292 = vand.u32 %v1291, 4294901760
    %1293 = vmatpush.msra.mxu0 %v1292
    %v1294 = vand.u32 %v77, 4294901760
    %v1295 = vsub.f32 %v77, %v1294
    %v1296 = vand.u32 %v1295, 4294901760
    %v1297 = vsub.f32 %v1295, %v1296
    %v1298 = vand.u32 %v1297, 4294901760
    %1299 = vmatpush.msra.mxu0 %v1298
    %v1300 = vand.u32 %v76, 4294901760
    %v1301 = vsub.f32 %v76, %v1300
    %v1302 = vand.u32 %v1301, 4294901760
    %v1303 = vsub.f32 %v1301, %v1302
    %v1304 = vand.u32 %v1303, 4294901760
    %1305 = vmatpush.msra.mxu0 %v1304
    %v1306 = vand.u32 %v75, 4294901760
    %v1307 = vsub.f32 %v75, %v1306
    %v1308 = vand.u32 %v1307, 4294901760
    %v1309 = vsub.f32 %v1307, %v1308
    %v1310 = vand.u32 %v1309, 4294901760
    %1311 = vmatpush.msra.mxu0 %v1310
    %v1312 = vand.u32 %v74, 4294901760
    %v1313 = vsub.f32 %v74, %v1312
    %v1314 = vand.u32 %v1313, 4294901760
    %v1315 = vsub.f32 %v1313, %v1314
    %v1316 = vand.u32 %v1315, 4294901760
    %1317 = vmatpush.msra.mxu0 %v1316
    %v1318 = vand.u32 %v73, 4294901760
    %v1319 = vsub.f32 %v73, %v1318
    %v1320 = vand.u32 %v1319, 4294901760
    %v1321 = vsub.f32 %v1319, %v1320
    %v1322 = vand.u32 %v1321, 4294901760
    %1323 = vmatpush.msra.mxu0 %v1322
    %v1324 = vand.u32 %v72, 4294901760
    %v1325 = vsub.f32 %v72, %v1324
    %v1326 = vand.u32 %v1325, 4294901760
    %v1327 = vsub.f32 %v1325, %v1326
    %v1328 = vand.u32 %v1327, 4294901760
    %1329 = vmatpush.msra.mxu0 %v1328
    %v1330 = vand.u32 %v71, 4294901760
    %v1331 = vsub.f32 %v71, %v1330
    %v1332 = vand.u32 %v1331, 4294901760
    %v1333 = vsub.f32 %v1331, %v1332
    %v1334 = vand.u32 %v1333, 4294901760
    %1335 = vmatpush.msra.mxu0 %v1334
    %v1336 = vand.u32 %v163, 4294901760
    %1337 = vmatmul.f32.gmra.mxu0 %v1336
    %v1338 = vpop.f32.mrf.mxu0
    %v1339 = vadd.f32 %v1238, %v1338
    %1340 = vdwg.mxu0
    %v1341 = vand.u32 %v86, 4294901760
    %v1342 = vsub.f32 %v86, %v1341
    %1343 = vmatpush.msra.mxu0 %v1342
    %v1344 = vand.u32 %v85, 4294901760
    %v1345 = vsub.f32 %v85, %v1344
    %1346 = vmatpush.msra.mxu0 %v1345
    %v1347 = vand.u32 %v84, 4294901760
    %v1348 = vsub.f32 %v84, %v1347
    %1349 = vmatpush.msra.mxu0 %v1348
    %v1350 = vand.u32 %v83, 4294901760
    %v1351 = vsub.f32 %v83, %v1350
    %1352 = vmatpush.msra.mxu0 %v1351
    %v1353 = vand.u32 %v82, 4294901760
    %v1354 = vsub.f32 %v82, %v1353
    %1355 = vmatpush.msra.mxu0 %v1354
    %v1356 = vand.u32 %v81, 4294901760
    %v1357 = vsub.f32 %v81, %v1356
    %1358 = vmatpush.msra.mxu0 %v1357
    %v1359 = vand.u32 %v80, 4294901760
    %v1360 = vsub.f32 %v80, %v1359
    %1361 = vmatpush.msra.mxu0 %v1360
    %v1362 = vand.u32 %v79, 4294901760
    %v1363 = vsub.f32 %v79, %v1362
    %1364 = vmatpush.msra.mxu0 %v1363
    %v1365 = vand.u32 %v78, 4294901760
    %v1366 = vsub.f32 %v78, %v1365
    %1367 = vmatpush.msra.mxu0 %v1366
    %v1368 = vand.u32 %v77, 4294901760
    %v1369 = vsub.f32 %v77, %v1368
    %1370 = vmatpush.msra.mxu0 %v1369
    %v1371 = vand.u32 %v76, 4294901760
    %v1372 = vsub.f32 %v76, %v1371
    %1373 = vmatpush.msra.mxu0 %v1372
    %v1374 = vand.u32 %v75, 4294901760
    %v1375 = vsub.f32 %v75, %v1374
    %1376 = vmatpush.msra.mxu0 %v1375
    %v1377 = vand.u32 %v74, 4294901760
    %v1378 = vsub.f32 %v74, %v1377
    %1379 = vmatpush.msra.mxu0 %v1378
    %v1380 = vand.u32 %v73, 4294901760
    %v1381 = vsub.f32 %v73, %v1380
    %1382 = vmatpush.msra.mxu0 %v1381
    %v1383 = vand.u32 %v72, 4294901760
    %v1384 = vsub.f32 %v72, %v1383
    %1385 = vmatpush.msra.mxu0 %v1384
    %v1386 = vand.u32 %v71, 4294901760
    %v1387 = vsub.f32 %v71, %v1386
    %1388 = vmatpush.msra.mxu0 %v1387
    %v1389 = vand.u32 %v163, 4294901760
    %v1390 = vsub.f32 %v163, %v1389
    %1391 = vmatmul.f32.gmra.mxu0 %v1390
    %v1392 = vpop.f32.mrf.mxu0
    %v1393 = vadd.f32 %v1339, %v1392
    %1394 = vdwg.mxu0
    %v1395 = vand.u32 %v86, 4294901760
    %1396 = vmatpush.msra.mxu0 %v1395
    %v1397 = vand.u32 %v85, 4294901760
    %1398 = vmatpush.msra.mxu0 %v1397
    %v1399 = vand.u32 %v84, 4294901760
    %1400 = vmatpush.msra.mxu0 %v1399
    %v1401 = vand.u32 %v83, 4294901760
    %1402 = vmatpush.msra.mxu0 %v1401
    %v1403 = vand.u32 %v82, 4294901760
    %1404 = vmatpush.msra.mxu0 %v1403
    %v1405 = vand.u32 %v81, 4294901760
    %1406 = vmatpush.msra.mxu0 %v1405
    %v1407 = vand.u32 %v80, 4294901760
    %1408 = vmatpush.msra.mxu0 %v1407
    %v1409 = vand.u32 %v79, 4294901760
    %1410 = vmatpush.msra.mxu0 %v1409
    %v1411 = vand.u32 %v78, 4294901760
    %1412 = vmatpush.msra.mxu0 %v1411
    %v1413 = vand.u32 %v77, 4294901760
    %1414 = vmatpush.msra.mxu0 %v1413
    %v1415 = vand.u32 %v76, 4294901760
    %1416 = vmatpush.msra.mxu0 %v1415
    %v1417 = vand.u32 %v75, 4294901760
    %1418 = vmatpush.msra.mxu0 %v1417
    %v1419 = vand.u32 %v74, 4294901760
    %1420 = vmatpush.msra.mxu0 %v1419
    %v1421 = vand.u32 %v73, 4294901760
    %1422 = vmatpush.msra.mxu0 %v1421
    %v1423 = vand.u32 %v72, 4294901760
    %1424 = vmatpush.msra.mxu0 %v1423
    %v1425 = vand.u32 %v71, 4294901760
    %1426 = vmatpush.msra.mxu0 %v1425
    %v1427 = vand.u32 %v163, 4294901760
    %v1428 = vsub.f32 %v163, %v1427
    %v1429 = vand.u32 %v1428, 4294901760
    %1430 = vmatmul.f32.gmra.mxu0 %v1429
    %v1431 = vpop.f32.mrf.mxu0
    %v1432 = vadd.f32 %v1393, %v1431
    %1433 = vdwg.mxu0
    %v1434 = vand.u32 %v86, 4294901760
    %v1435 = vsub.f32 %v86, %v1434
    %v1436 = vand.u32 %v1435, 4294901760
    %1437 = vmatpush.msra.mxu0 %v1436
    %v1438 = vand.u32 %v85, 4294901760
    %v1439 = vsub.f32 %v85, %v1438
    %v1440 = vand.u32 %v1439, 4294901760
    %1441 = vmatpush.msra.mxu0 %v1440
    %v1442 = vand.u32 %v84, 4294901760
    %v1443 = vsub.f32 %v84, %v1442
    %v1444 = vand.u32 %v1443, 4294901760
    %1445 = vmatpush.msra.mxu0 %v1444
    %v1446 = vand.u32 %v83, 4294901760
    %v1447 = vsub.f32 %v83, %v1446
    %v1448 = vand.u32 %v1447, 4294901760
    %1449 = vmatpush.msra.mxu0 %v1448
    %v1450 = vand.u32 %v82, 4294901760
    %v1451 = vsub.f32 %v82, %v1450
    %v1452 = vand.u32 %v1451, 4294901760
    %1453 = vmatpush.msra.mxu0 %v1452
    %v1454 = vand.u32 %v81, 4294901760
    %v1455 = vsub.f32 %v81, %v1454
    %v1456 = vand.u32 %v1455, 4294901760
    %1457 = vmatpush.msra.mxu0 %v1456
    %v1458 = vand.u32 %v80, 4294901760
    %v1459 = vsub.f32 %v80, %v1458
    %v1460 = vand.u32 %v1459, 4294901760
    %1461 = vmatpush.msra.mxu0 %v1460
    %v1462 = vand.u32 %v79, 4294901760
    %v1463 = vsub.f32 %v79, %v1462
    %v1464 = vand.u32 %v1463, 4294901760
    %1465 = vmatpush.msra.mxu0 %v1464
    %v1466 = vand.u32 %v78, 4294901760
    %v1467 = vsub.f32 %v78, %v1466
    %v1468 = vand.u32 %v1467, 4294901760
    %1469 = vmatpush.msra.mxu0 %v1468
    %v1470 = vand.u32 %v77, 4294901760
    %v1471 = vsub.f32 %v77, %v1470
    %v1472 = vand.u32 %v1471, 4294901760
    %1473 = vmatpush.msra.mxu0 %v1472
    %v1474 = vand.u32 %v76, 4294901760
    %v1475 = vsub.f32 %v76, %v1474
    %v1476 = vand.u32 %v1475, 4294901760
    %1477 = vmatpush.msra.mxu0 %v1476
    %v1478 = vand.u32 %v75, 4294901760
    %v1479 = vsub.f32 %v75, %v1478
    %v1480 = vand.u32 %v1479, 4294901760
    %1481 = vmatpush.msra.mxu0 %v1480
    %v1482 = vand.u32 %v74, 4294901760
    %v1483 = vsub.f32 %v74, %v1482
    %v1484 = vand.u32 %v1483, 4294901760
    %1485 = vmatpush.msra.mxu0 %v1484
    %v1486 = vand.u32 %v73, 4294901760
    %v1487 = vsub.f32 %v73, %v1486
    %v1488 = vand.u32 %v1487, 4294901760
    %1489 = vmatpush.msra.mxu0 %v1488
    %v1490 = vand.u32 %v72, 4294901760
    %v1491 = vsub.f32 %v72, %v1490
    %v1492 = vand.u32 %v1491, 4294901760
    %1493 = vmatpush.msra.mxu0 %v1492
    %v1494 = vand.u32 %v71, 4294901760
    %v1495 = vsub.f32 %v71, %v1494
    %v1496 = vand.u32 %v1495, 4294901760
    %1497 = vmatpush.msra.mxu0 %v1496
    %v1498 = vand.u32 %v163, 4294901760
    %1499 = vmatmul.f32.gmra.mxu0 %v1498
    %v1500 = vpop.f32.mrf.mxu0
    %v1501 = vadd.f32 %v1432, %v1500
    %1502 = vdwg.mxu0
    %v1503 = vand.u32 %v86, 4294901760
    %1504 = vmatpush.msra.mxu0 %v1503
    %v1505 = vand.u32 %v85, 4294901760
    %1506 = vmatpush.msra.mxu0 %v1505
    %v1507 = vand.u32 %v84, 4294901760
    %1508 = vmatpush.msra.mxu0 %v1507
    %v1509 = vand.u32 %v83, 4294901760
    %1510 = vmatpush.msra.mxu0 %v1509
    %v1511 = vand.u32 %v82, 4294901760
    %1512 = vmatpush.msra.mxu0 %v1511
    %v1513 = vand.u32 %v81, 4294901760
    %1514 = vmatpush.msra.mxu0 %v1513
    %v1515 = vand.u32 %v80, 4294901760
    %1516 = vmatpush.msra.mxu0 %v1515
    %v1517 = vand.u32 %v79, 4294901760
    %1518 = vmatpush.msra.mxu0 %v1517
    %v1519 = vand.u32 %v78, 4294901760
    %1520 = vmatpush.msra.mxu0 %v1519
    %v1521 = vand.u32 %v77, 4294901760
    %1522 = vmatpush.msra.mxu0 %v1521
    %v1523 = vand.u32 %v76, 4294901760
    %1524 = vmatpush.msra.mxu0 %v1523
    %v1525 = vand.u32 %v75, 4294901760
    %1526 = vmatpush.msra.mxu0 %v1525
    %v1527 = vand.u32 %v74, 4294901760
    %1528 = vmatpush.msra.mxu0 %v1527
    %v1529 = vand.u32 %v73, 4294901760
    %1530 = vmatpush.msra.mxu0 %v1529
    %v1531 = vand.u32 %v72, 4294901760
    %1532 = vmatpush.msra.mxu0 %v1531
    %v1533 = vand.u32 %v71, 4294901760
    %1534 = vmatpush.msra.mxu0 %v1533
    %v1535 = vand.u32 %v163, 4294901760
    %1536 = vmatmul.f32.gmra.mxu0 %v1535
    %v1537 = vpop.f32.mrf.mxu0
    %v1538 = vadd.f32 %v1501, %v1537
    %1539 = vdwg.mxu0
    %v1540 = vand.u32 %v102, 4294901760
    %1541 = vmatpush.msra.mxu0 %v1540
    %v1542 = vand.u32 %v101, 4294901760
    %1543 = vmatpush.msra.mxu0 %v1542
    %v1544 = vand.u32 %v100, 4294901760
    %1545 = vmatpush.msra.mxu0 %v1544
    %v1546 = vand.u32 %v99, 4294901760
    %1547 = vmatpush.msra.mxu0 %v1546
    %v1548 = vand.u32 %v98, 4294901760
    %1549 = vmatpush.msra.mxu0 %v1548
    %v1550 = vand.u32 %v97, 4294901760
    %1551 = vmatpush.msra.mxu0 %v1550
    %v1552 = vand.u32 %v96, 4294901760
    %1553 = vmatpush.msra.mxu0 %v1552
    %v1554 = vand.u32 %v95, 4294901760
    %1555 = vmatpush.msra.mxu0 %v1554
    %v1556 = vand.u32 %v94, 4294901760
    %1557 = vmatpush.msra.mxu0 %v1556
    %v1558 = vand.u32 %v93, 4294901760
    %1559 = vmatpush.msra.mxu0 %v1558
    %v1560 = vand.u32 %v92, 4294901760
    %1561 = vmatpush.msra.mxu0 %v1560
    %v1562 = vand.u32 %v91, 4294901760
    %1563 = vmatpush.msra.mxu0 %v1562
    %v1564 = vand.u32 %v90, 4294901760
    %1565 = vmatpush.msra.mxu0 %v1564
    %v1566 = vand.u32 %v89, 4294901760
    %1567 = vmatpush.msra.mxu0 %v1566
    %v1568 = vand.u32 %v88, 4294901760
    %1569 = vmatpush.msra.mxu0 %v1568
    %v1570 = vand.u32 %v87, 4294901760
    %1571 = vmatpush.msra.mxu0 %v1570
    %v1572 = vand.u32 %v164, 4294901760
    %v1573 = vsub.f32 %v164, %v1572
    %v1574 = vand.u32 %v1573, 4294901760
    %v1575 = vsub.f32 %v1573, %v1574
    %v1576 = vand.u32 %v1575, 4294901760
    %1577 = vmatmul.f32.gmra.mxu0 %v1576
    %v1578 = vpop.f32.mrf.mxu0
    %v1579 = vadd.f32 %v1538, %v1578
    %1580 = vdwg.mxu0
    %v1581 = vand.u32 %v102, 4294901760
    %v1582 = vsub.f32 %v102, %v1581
    %v1583 = vand.u32 %v1582, 4294901760
    %v1584 = vsub.f32 %v1582, %v1583
    %v1585 = vand.u32 %v1584, 4294901760
    %1586 = vmatpush.msra.mxu0 %v1585
    %v1587 = vand.u32 %v101, 4294901760
    %v1588 = vsub.f32 %v101, %v1587
    %v1589 = vand.u32 %v1588, 4294901760
    %v1590 = vsub.f32 %v1588, %v1589
    %v1591 = vand.u32 %v1590, 4294901760
    %1592 = vmatpush.msra.mxu0 %v1591
    %v1593 = vand.u32 %v100, 4294901760
    %v1594 = vsub.f32 %v100, %v1593
    %v1595 = vand.u32 %v1594, 4294901760
    %v1596 = vsub.f32 %v1594, %v1595
    %v1597 = vand.u32 %v1596, 4294901760
    %1598 = vmatpush.msra.mxu0 %v1597
    %v1599 = vand.u32 %v99, 4294901760
    %v1600 = vsub.f32 %v99, %v1599
    %v1601 = vand.u32 %v1600, 4294901760
    %v1602 = vsub.f32 %v1600, %v1601
    %v1603 = vand.u32 %v1602, 4294901760
    %1604 = vmatpush.msra.mxu0 %v1603
    %v1605 = vand.u32 %v98, 4294901760
    %v1606 = vsub.f32 %v98, %v1605
    %v1607 = vand.u32 %v1606, 4294901760
    %v1608 = vsub.f32 %v1606, %v1607
    %v1609 = vand.u32 %v1608, 4294901760
    %1610 = vmatpush.msra.mxu0 %v1609
    %v1611 = vand.u32 %v97, 4294901760
    %v1612 = vsub.f32 %v97, %v1611
    %v1613 = vand.u32 %v1612, 4294901760
    %v1614 = vsub.f32 %v1612, %v1613
    %v1615 = vand.u32 %v1614, 4294901760
    %1616 = vmatpush.msra.mxu0 %v1615
    %v1617 = vand.u32 %v96, 4294901760
    %v1618 = vsub.f32 %v96, %v1617
    %v1619 = vand.u32 %v1618, 4294901760
    %v1620 = vsub.f32 %v1618, %v1619
    %v1621 = vand.u32 %v1620, 4294901760
    %1622 = vmatpush.msra.mxu0 %v1621
    %v1623 = vand.u32 %v95, 4294901760
    %v1624 = vsub.f32 %v95, %v1623
    %v1625 = vand.u32 %v1624, 4294901760
    %v1626 = vsub.f32 %v1624, %v1625
    %v1627 = vand.u32 %v1626, 4294901760
    %1628 = vmatpush.msra.mxu0 %v1627
    %v1629 = vand.u32 %v94, 4294901760
    %v1630 = vsub.f32 %v94, %v1629
    %v1631 = vand.u32 %v1630, 4294901760
    %v1632 = vsub.f32 %v1630, %v1631
    %v1633 = vand.u32 %v1632, 4294901760
    %1634 = vmatpush.msra.mxu0 %v1633
    %v1635 = vand.u32 %v93, 4294901760
    %v1636 = vsub.f32 %v93, %v1635
    %v1637 = vand.u32 %v1636, 4294901760
    %v1638 = vsub.f32 %v1636, %v1637
    %v1639 = vand.u32 %v1638, 4294901760
    %1640 = vmatpush.msra.mxu0 %v1639
    %v1641 = vand.u32 %v92, 4294901760
    %v1642 = vsub.f32 %v92, %v1641
    %v1643 = vand.u32 %v1642, 4294901760
    %v1644 = vsub.f32 %v1642, %v1643
    %v1645 = vand.u32 %v1644, 4294901760
    %1646 = vmatpush.msra.mxu0 %v1645
    %v1647 = vand.u32 %v91, 4294901760
    %v1648 = vsub.f32 %v91, %v1647
    %v1649 = vand.u32 %v1648, 4294901760
    %v1650 = vsub.f32 %v1648, %v1649
    %v1651 = vand.u32 %v1650, 4294901760
    %1652 = vmatpush.msra.mxu0 %v1651
    %v1653 = vand.u32 %v90, 4294901760
    %v1654 = vsub.f32 %v90, %v1653
    %v1655 = vand.u32 %v1654, 4294901760
    %v1656 = vsub.f32 %v1654, %v1655
    %v1657 = vand.u32 %v1656, 4294901760
    %1658 = vmatpush.msra.mxu0 %v1657
    %v1659 = vand.u32 %v89, 4294901760
    %v1660 = vsub.f32 %v89, %v1659
    %v1661 = vand.u32 %v1660, 4294901760
    %v1662 = vsub.f32 %v1660, %v1661
    %v1663 = vand.u32 %v1662, 4294901760
    %1664 = vmatpush.msra.mxu0 %v1663
    %v1665 = vand.u32 %v88, 4294901760
    %v1666 = vsub.f32 %v88, %v1665
    %v1667 = vand.u32 %v1666, 4294901760
    %v1668 = vsub.f32 %v1666, %v1667
    %v1669 = vand.u32 %v1668, 4294901760
    %1670 = vmatpush.msra.mxu0 %v1669
    %v1671 = vand.u32 %v87, 4294901760
    %v1672 = vsub.f32 %v87, %v1671
    %v1673 = vand.u32 %v1672, 4294901760
    %v1674 = vsub.f32 %v1672, %v1673
    %v1675 = vand.u32 %v1674, 4294901760
    %1676 = vmatpush.msra.mxu0 %v1675
    %v1677 = vand.u32 %v164, 4294901760
    %1678 = vmatmul.f32.gmra.mxu0 %v1677
    %v1679 = vpop.f32.mrf.mxu0
    %v1680 = vadd.f32 %v1579, %v1679
    %1681 = vdwg.mxu0
    %v1682 = vand.u32 %v102, 4294901760
    %v1683 = vsub.f32 %v102, %v1682
    %1684 = vmatpush.msra.mxu0 %v1683
    %v1685 = vand.u32 %v101, 4294901760
    %v1686 = vsub.f32 %v101, %v1685
    %1687 = vmatpush.msra.mxu0 %v1686
    %v1688 = vand.u32 %v100, 4294901760
    %v1689 = vsub.f32 %v100, %v1688
    %1690 = vmatpush.msra.mxu0 %v1689
    %v1691 = vand.u32 %v99, 4294901760
    %v1692 = vsub.f32 %v99, %v1691
    %1693 = vmatpush.msra.mxu0 %v1692
    %v1694 = vand.u32 %v98, 4294901760
    %v1695 = vsub.f32 %v98, %v1694
    %1696 = vmatpush.msra.mxu0 %v1695
    %v1697 = vand.u32 %v97, 4294901760
    %v1698 = vsub.f32 %v97, %v1697
    %1699 = vmatpush.msra.mxu0 %v1698
    %v1700 = vand.u32 %v96, 4294901760
    %v1701 = vsub.f32 %v96, %v1700
    %1702 = vmatpush.msra.mxu0 %v1701
    %v1703 = vand.u32 %v95, 4294901760
    %v1704 = vsub.f32 %v95, %v1703
    %1705 = vmatpush.msra.mxu0 %v1704
    %v1706 = vand.u32 %v94, 4294901760
    %v1707 = vsub.f32 %v94, %v1706
    %1708 = vmatpush.msra.mxu0 %v1707
    %v1709 = vand.u32 %v93, 4294901760
    %v1710 = vsub.f32 %v93, %v1709
    %1711 = vmatpush.msra.mxu0 %v1710
    %v1712 = vand.u32 %v92, 4294901760
    %v1713 = vsub.f32 %v92, %v1712
    %1714 = vmatpush.msra.mxu0 %v1713
    %v1715 = vand.u32 %v91, 4294901760
    %v1716 = vsub.f32 %v91, %v1715
    %1717 = vmatpush.msra.mxu0 %v1716
    %v1718 = vand.u32 %v90, 4294901760
    %v1719 = vsub.f32 %v90, %v1718
    %1720 = vmatpush.msra.mxu0 %v1719
    %v1721 = vand.u32 %v89, 4294901760
    %v1722 = vsub.f32 %v89, %v1721
    %1723 = vmatpush.msra.mxu0 %v1722
    %v1724 = vand.u32 %v88, 4294901760
    %v1725 = vsub.f32 %v88, %v1724
    %1726 = vmatpush.msra.mxu0 %v1725
    %v1727 = vand.u32 %v87, 4294901760
    %v1728 = vsub.f32 %v87, %v1727
    %1729 = vmatpush.msra.mxu0 %v1728
    %v1730 = vand.u32 %v164, 4294901760
    %v1731 = vsub.f32 %v164, %v1730
    %1732 = vmatmul.f32.gmra.mxu0 %v1731
    %v1733 = vpop.f32.mrf.mxu0
    %v1734 = vadd.f32 %v1680, %v1733
    %1735 = vdwg.mxu0
    %v1736 = vand.u32 %v102, 4294901760
    %1737 = vmatpush.msra.mxu0 %v1736
    %v1738 = vand.u32 %v101, 4294901760
    %1739 = vmatpush.msra.mxu0 %v1738
    %v1740 = vand.u32 %v100, 4294901760
    %1741 = vmatpush.msra.mxu0 %v1740
    %v1742 = vand.u32 %v99, 4294901760
    %1743 = vmatpush.msra.mxu0 %v1742
    %v1744 = vand.u32 %v98, 4294901760
    %1745 = vmatpush.msra.mxu0 %v1744
    %v1746 = vand.u32 %v97, 4294901760
    %1747 = vmatpush.msra.mxu0 %v1746
    %v1748 = vand.u32 %v96, 4294901760
    %1749 = vmatpush.msra.mxu0 %v1748
    %v1750 = vand.u32 %v95, 4294901760
    %1751 = vmatpush.msra.mxu0 %v1750
    %v1752 = vand.u32 %v94, 4294901760
    %1753 = vmatpush.msra.mxu0 %v1752
    %v1754 = vand.u32 %v93, 4294901760
    %1755 = vmatpush.msra.mxu0 %v1754
    %v1756 = vand.u32 %v92, 4294901760
    %1757 = vmatpush.msra.mxu0 %v1756
    %v1758 = vand.u32 %v91, 4294901760
    %1759 = vmatpush.msra.mxu0 %v1758
    %v1760 = vand.u32 %v90, 4294901760
    %1761 = vmatpush.msra.mxu0 %v1760
    %v1762 = vand.u32 %v89, 4294901760
    %1763 = vmatpush.msra.mxu0 %v1762
    %v1764 = vand.u32 %v88, 4294901760
    %1765 = vmatpush.msra.mxu0 %v1764
    %v1766 = vand.u32 %v87, 4294901760
    %1767 = vmatpush.msra.mxu0 %v1766
    %v1768 = vand.u32 %v164, 4294901760
    %v1769 = vsub.f32 %v164, %v1768
    %v1770 = vand.u32 %v1769, 4294901760
    %1771 = vmatmul.f32.gmra.mxu0 %v1770
    %v1772 = vpop.f32.mrf.mxu0
    %v1773 = vadd.f32 %v1734, %v1772
    %1774 = vdwg.mxu0
    %v1775 = vand.u32 %v102, 4294901760
    %v1776 = vsub.f32 %v102, %v1775
    %v1777 = vand.u32 %v1776, 4294901760
    %1778 = vmatpush.msra.mxu0 %v1777
    %v1779 = vand.u32 %v101, 4294901760
    %v1780 = vsub.f32 %v101, %v1779
    %v1781 = vand.u32 %v1780, 4294901760
    %1782 = vmatpush.msra.mxu0 %v1781
    %v1783 = vand.u32 %v100, 4294901760
    %v1784 = vsub.f32 %v100, %v1783
    %v1785 = vand.u32 %v1784, 4294901760
    %1786 = vmatpush.msra.mxu0 %v1785
    %v1787 = vand.u32 %v99, 4294901760
    %v1788 = vsub.f32 %v99, %v1787
    %v1789 = vand.u32 %v1788, 4294901760
    %1790 = vmatpush.msra.mxu0 %v1789
    %v1791 = vand.u32 %v98, 4294901760
    %v1792 = vsub.f32 %v98, %v1791
    %v1793 = vand.u32 %v1792, 4294901760
    %1794 = vmatpush.msra.mxu0 %v1793
    %v1795 = vand.u32 %v97, 4294901760
    %v1796 = vsub.f32 %v97, %v1795
    %v1797 = vand.u32 %v1796, 4294901760
    %1798 = vmatpush.msra.mxu0 %v1797
    %v1799 = vand.u32 %v96, 4294901760
    %v1800 = vsub.f32 %v96, %v1799
    %v1801 = vand.u32 %v1800, 4294901760
    %1802 = vmatpush.msra.mxu0 %v1801
    %v1803 = vand.u32 %v95, 4294901760
    %v1804 = vsub.f32 %v95, %v1803
    %v1805 = vand.u32 %v1804, 4294901760
    %1806 = vmatpush.msra.mxu0 %v1805
    %v1807 = vand.u32 %v94, 4294901760
    %v1808 = vsub.f32 %v94, %v1807
    %v1809 = vand.u32 %v1808, 4294901760
    %1810 = vmatpush.msra.mxu0 %v1809
    %v1811 = vand.u32 %v93, 4294901760
    %v1812 = vsub.f32 %v93, %v1811
    %v1813 = vand.u32 %v1812, 4294901760
    %1814 = vmatpush.msra.mxu0 %v1813
    %v1815 = vand.u32 %v92, 4294901760
    %v1816 = vsub.f32 %v92, %v1815
    %v1817 = vand.u32 %v1816, 4294901760
    %1818 = vmatpush.msra.mxu0 %v1817
    %v1819 = vand.u32 %v91, 4294901760
    %v1820 = vsub.f32 %v91, %v1819
    %v1821 = vand.u32 %v1820, 4294901760
    %1822 = vmatpush.msra.mxu0 %v1821
    %v1823 = vand.u32 %v90, 4294901760
    %v1824 = vsub.f32 %v90, %v1823
    %v1825 = vand.u32 %v1824, 4294901760
    %1826 = vmatpush.msra.mxu0 %v1825
    %v1827 = vand.u32 %v89, 4294901760
    %v1828 = vsub.f32 %v89, %v1827
    %v1829 = vand.u32 %v1828, 4294901760
    %1830 = vmatpush.msra.mxu0 %v1829
    %v1831 = vand.u32 %v88, 4294901760
    %v1832 = vsub.f32 %v88, %v1831
    %v1833 = vand.u32 %v1832, 4294901760
    %1834 = vmatpush.msra.mxu0 %v1833
    %v1835 = vand.u32 %v87, 4294901760
    %v1836 = vsub.f32 %v87, %v1835
    %v1837 = vand.u32 %v1836, 4294901760
    %1838 = vmatpush.msra.mxu0 %v1837
    %v1839 = vand.u32 %v164, 4294901760
    %1840 = vmatmul.f32.gmra.mxu0 %v1839
    %v1841 = vpop.f32.mrf.mxu0
    %v1842 = vadd.f32 %v1773, %v1841
    %1843 = vdwg.mxu0
    %v1844 = vand.u32 %v102, 4294901760
    %1845 = vmatpush.msra.mxu0 %v1844
    %v1846 = vand.u32 %v101, 4294901760
    %1847 = vmatpush.msra.mxu0 %v1846
    %v1848 = vand.u32 %v100, 4294901760
    %1849 = vmatpush.msra.mxu0 %v1848
    %v1850 = vand.u32 %v99, 4294901760
    %1851 = vmatpush.msra.mxu0 %v1850
    %v1852 = vand.u32 %v98, 4294901760
    %1853 = vmatpush.msra.mxu0 %v1852
    %v1854 = vand.u32 %v97, 4294901760
    %1855 = vmatpush.msra.mxu0 %v1854
    %v1856 = vand.u32 %v96, 4294901760
    %1857 = vmatpush.msra.mxu0 %v1856
    %v1858 = vand.u32 %v95, 4294901760
    %1859 = vmatpush.msra.mxu0 %v1858
    %v1860 = vand.u32 %v94, 4294901760
    %1861 = vmatpush.msra.mxu0 %v1860
    %v1862 = vand.u32 %v93, 4294901760
    %1863 = vmatpush.msra.mxu0 %v1862
    %v1864 = vand.u32 %v92, 4294901760
    %1865 = vmatpush.msra.mxu0 %v1864
    %v1866 = vand.u32 %v91, 4294901760
    %1867 = vmatpush.msra.mxu0 %v1866
    %v1868 = vand.u32 %v90, 4294901760
    %1869 = vmatpush.msra.mxu0 %v1868
    %v1870 = vand.u32 %v89, 4294901760
    %1871 = vmatpush.msra.mxu0 %v1870
    %v1872 = vand.u32 %v88, 4294901760
    %1873 = vmatpush.msra.mxu0 %v1872
    %v1874 = vand.u32 %v87, 4294901760
    %1875 = vmatpush.msra.mxu0 %v1874
    %v1876 = vand.u32 %v164, 4294901760
    %1877 = vmatmul.f32.gmra.mxu0 %v1876
    %v1878 = vpop.f32.mrf.mxu0
    %v1879 = vadd.f32 %v1842, %v1878
    %1880 = vdwg.mxu0
    %v1881 = vand.u32 %v118, 4294901760
    %1882 = vmatpush.msra.mxu0 %v1881
    %v1883 = vand.u32 %v117, 4294901760
    %1884 = vmatpush.msra.mxu0 %v1883
    %v1885 = vand.u32 %v116, 4294901760
    %1886 = vmatpush.msra.mxu0 %v1885
    %v1887 = vand.u32 %v115, 4294901760
    %1888 = vmatpush.msra.mxu0 %v1887
    %v1889 = vand.u32 %v114, 4294901760
    %1890 = vmatpush.msra.mxu0 %v1889
    %v1891 = vand.u32 %v113, 4294901760
    %1892 = vmatpush.msra.mxu0 %v1891
    %v1893 = vand.u32 %v112, 4294901760
    %1894 = vmatpush.msra.mxu0 %v1893
    %v1895 = vand.u32 %v111, 4294901760
    %1896 = vmatpush.msra.mxu0 %v1895
    %v1897 = vand.u32 %v110, 4294901760
    %1898 = vmatpush.msra.mxu0 %v1897
    %v1899 = vand.u32 %v109, 4294901760
    %1900 = vmatpush.msra.mxu0 %v1899
    %v1901 = vand.u32 %v108, 4294901760
    %1902 = vmatpush.msra.mxu0 %v1901
    %v1903 = vand.u32 %v107, 4294901760
    %1904 = vmatpush.msra.mxu0 %v1903
    %v1905 = vand.u32 %v106, 4294901760
    %1906 = vmatpush.msra.mxu0 %v1905
    %v1907 = vand.u32 %v105, 4294901760
    %1908 = vmatpush.msra.mxu0 %v1907
    %v1909 = vand.u32 %v104, 4294901760
    %1910 = vmatpush.msra.mxu0 %v1909
    %v1911 = vand.u32 %v103, 4294901760
    %1912 = vmatpush.msra.mxu0 %v1911
    %v1913 = vand.u32 %v165, 4294901760
    %v1914 = vsub.f32 %v165, %v1913
    %v1915 = vand.u32 %v1914, 4294901760
    %v1916 = vsub.f32 %v1914, %v1915
    %v1917 = vand.u32 %v1916, 4294901760
    %1918 = vmatmul.f32.gmra.mxu0 %v1917
    %v1919 = vpop.f32.mrf.mxu0
    %v1920 = vadd.f32 %v1879, %v1919
    %1921 = vdwg.mxu0
    %v1922 = vand.u32 %v118, 4294901760
    %v1923 = vsub.f32 %v118, %v1922
    %v1924 = vand.u32 %v1923, 4294901760
    %v1925 = vsub.f32 %v1923, %v1924
    %v1926 = vand.u32 %v1925, 4294901760
    %1927 = vmatpush.msra.mxu0 %v1926
    %v1928 = vand.u32 %v117, 4294901760
    %v1929 = vsub.f32 %v117, %v1928
    %v1930 = vand.u32 %v1929, 4294901760
    %v1931 = vsub.f32 %v1929, %v1930
    %v1932 = vand.u32 %v1931, 4294901760
    %1933 = vmatpush.msra.mxu0 %v1932
    %v1934 = vand.u32 %v116, 4294901760
    %v1935 = vsub.f32 %v116, %v1934
    %v1936 = vand.u32 %v1935, 4294901760
    %v1937 = vsub.f32 %v1935, %v1936
    %v1938 = vand.u32 %v1937, 4294901760
    %1939 = vmatpush.msra.mxu0 %v1938
    %v1940 = vand.u32 %v115, 4294901760
    %v1941 = vsub.f32 %v115, %v1940
    %v1942 = vand.u32 %v1941, 4294901760
    %v1943 = vsub.f32 %v1941, %v1942
    %v1944 = vand.u32 %v1943, 4294901760
    %1945 = vmatpush.msra.mxu0 %v1944
    %v1946 = vand.u32 %v114, 4294901760
    %v1947 = vsub.f32 %v114, %v1946
    %v1948 = vand.u32 %v1947, 4294901760
    %v1949 = vsub.f32 %v1947, %v1948
    %v1950 = vand.u32 %v1949, 4294901760
    %1951 = vmatpush.msra.mxu0 %v1950
    %v1952 = vand.u32 %v113, 4294901760
    %v1953 = vsub.f32 %v113, %v1952
    %v1954 = vand.u32 %v1953, 4294901760
    %v1955 = vsub.f32 %v1953, %v1954
    %v1956 = vand.u32 %v1955, 4294901760
    %1957 = vmatpush.msra.mxu0 %v1956
    %v1958 = vand.u32 %v112, 4294901760
    %v1959 = vsub.f32 %v112, %v1958
    %v1960 = vand.u32 %v1959, 4294901760
    %v1961 = vsub.f32 %v1959, %v1960
    %v1962 = vand.u32 %v1961, 4294901760
    %1963 = vmatpush.msra.mxu0 %v1962
    %v1964 = vand.u32 %v111, 4294901760
    %v1965 = vsub.f32 %v111, %v1964
    %v1966 = vand.u32 %v1965, 4294901760
    %v1967 = vsub.f32 %v1965, %v1966
    %v1968 = vand.u32 %v1967, 4294901760
    %1969 = vmatpush.msra.mxu0 %v1968
    %v1970 = vand.u32 %v110, 4294901760
    %v1971 = vsub.f32 %v110, %v1970
    %v1972 = vand.u32 %v1971, 4294901760
    %v1973 = vsub.f32 %v1971, %v1972
    %v1974 = vand.u32 %v1973, 4294901760
    %1975 = vmatpush.msra.mxu0 %v1974
    %v1976 = vand.u32 %v109, 4294901760
    %v1977 = vsub.f32 %v109, %v1976
    %v1978 = vand.u32 %v1977, 4294901760
    %v1979 = vsub.f32 %v1977, %v1978
    %v1980 = vand.u32 %v1979, 4294901760
    %1981 = vmatpush.msra.mxu0 %v1980
    %v1982 = vand.u32 %v108, 4294901760
    %v1983 = vsub.f32 %v108, %v1982
    %v1984 = vand.u32 %v1983, 4294901760
    %v1985 = vsub.f32 %v1983, %v1984
    %v1986 = vand.u32 %v1985, 4294901760
    %1987 = vmatpush.msra.mxu0 %v1986
    %v1988 = vand.u32 %v107, 4294901760
    %v1989 = vsub.f32 %v107, %v1988
    %v1990 = vand.u32 %v1989, 4294901760
    %v1991 = vsub.f32 %v1989, %v1990
    %v1992 = vand.u32 %v1991, 4294901760
    %1993 = vmatpush.msra.mxu0 %v1992
    %v1994 = vand.u32 %v106, 4294901760
    %v1995 = vsub.f32 %v106, %v1994
    %v1996 = vand.u32 %v1995, 4294901760
    %v1997 = vsub.f32 %v1995, %v1996
    %v1998 = vand.u32 %v1997, 4294901760
    %1999 = vmatpush.msra.mxu0 %v1998
    %v2000 = vand.u32 %v105, 4294901760
    %v2001 = vsub.f32 %v105, %v2000
    %v2002 = vand.u32 %v2001, 4294901760
    %v2003 = vsub.f32 %v2001, %v2002
    %v2004 = vand.u32 %v2003, 4294901760
    %2005 = vmatpush.msra.mxu0 %v2004
    %v2006 = vand.u32 %v104, 4294901760
    %v2007 = vsub.f32 %v104, %v2006
    %v2008 = vand.u32 %v2007, 4294901760
    %v2009 = vsub.f32 %v2007, %v2008
    %v2010 = vand.u32 %v2009, 4294901760
    %2011 = vmatpush.msra.mxu0 %v2010
    %v2012 = vand.u32 %v103, 4294901760
    %v2013 = vsub.f32 %v103, %v2012
    %v2014 = vand.u32 %v2013, 4294901760
    %v2015 = vsub.f32 %v2013, %v2014
    %v2016 = vand.u32 %v2015, 4294901760
    %2017 = vmatpush.msra.mxu0 %v2016
    %v2018 = vand.u32 %v165, 4294901760
    %2019 = vmatmul.f32.gmra.mxu0 %v2018
    %v2020 = vpop.f32.mrf.mxu0
    %v2021 = vadd.f32 %v1920, %v2020
    %2022 = vdwg.mxu0
    %v2023 = vand.u32 %v118, 4294901760
    %v2024 = vsub.f32 %v118, %v2023
    %2025 = vmatpush.msra.mxu0 %v2024
    %v2026 = vand.u32 %v117, 4294901760
    %v2027 = vsub.f32 %v117, %v2026
    %2028 = vmatpush.msra.mxu0 %v2027
    %v2029 = vand.u32 %v116, 4294901760
    %v2030 = vsub.f32 %v116, %v2029
    %2031 = vmatpush.msra.mxu0 %v2030
    %v2032 = vand.u32 %v115, 4294901760
    %v2033 = vsub.f32 %v115, %v2032
    %2034 = vmatpush.msra.mxu0 %v2033
    %v2035 = vand.u32 %v114, 4294901760
    %v2036 = vsub.f32 %v114, %v2035
    %2037 = vmatpush.msra.mxu0 %v2036
    %v2038 = vand.u32 %v113, 4294901760
    %v2039 = vsub.f32 %v113, %v2038
    %2040 = vmatpush.msra.mxu0 %v2039
    %v2041 = vand.u32 %v112, 4294901760
    %v2042 = vsub.f32 %v112, %v2041
    %2043 = vmatpush.msra.mxu0 %v2042
    %v2044 = vand.u32 %v111, 4294901760
    %v2045 = vsub.f32 %v111, %v2044
    %2046 = vmatpush.msra.mxu0 %v2045
    %v2047 = vand.u32 %v110, 4294901760
    %v2048 = vsub.f32 %v110, %v2047
    %2049 = vmatpush.msra.mxu0 %v2048
    %v2050 = vand.u32 %v109, 4294901760
    %v2051 = vsub.f32 %v109, %v2050
    %2052 = vmatpush.msra.mxu0 %v2051
    %v2053 = vand.u32 %v108, 4294901760
    %v2054 = vsub.f32 %v108, %v2053
    %2055 = vmatpush.msra.mxu0 %v2054
    %v2056 = vand.u32 %v107, 4294901760
    %v2057 = vsub.f32 %v107, %v2056
    %2058 = vmatpush.msra.mxu0 %v2057
    %v2059 = vand.u32 %v106, 4294901760
    %v2060 = vsub.f32 %v106, %v2059
    %2061 = vmatpush.msra.mxu0 %v2060
    %v2062 = vand.u32 %v105, 4294901760
    %v2063 = vsub.f32 %v105, %v2062
    %2064 = vmatpush.msra.mxu0 %v2063
    %v2065 = vand.u32 %v104, 4294901760
    %v2066 = vsub.f32 %v104, %v2065
    %2067 = vmatpush.msra.mxu0 %v2066
    %v2068 = vand.u32 %v103, 4294901760
    %v2069 = vsub.f32 %v103, %v2068
    %2070 = vmatpush.msra.mxu0 %v2069
    %v2071 = vand.u32 %v165, 4294901760
    %v2072 = vsub.f32 %v165, %v2071
    %2073 = vmatmul.f32.gmra.mxu0 %v2072
    %v2074 = vpop.f32.mrf.mxu0
    %v2075 = vadd.f32 %v2021, %v2074
    %2076 = vdwg.mxu0
    %v2077 = vand.u32 %v118, 4294901760
    %2078 = vmatpush.msra.mxu0 %v2077
    %v2079 = vand.u32 %v117, 4294901760
    %2080 = vmatpush.msra.mxu0 %v2079
    %v2081 = vand.u32 %v116, 4294901760
    %2082 = vmatpush.msra.mxu0 %v2081
    %v2083 = vand.u32 %v115, 4294901760
    %2084 = vmatpush.msra.mxu0 %v2083
    %v2085 = vand.u32 %v114, 4294901760
    %2086 = vmatpush.msra.mxu0 %v2085
    %v2087 = vand.u32 %v113, 4294901760
    %2088 = vmatpush.msra.mxu0 %v2087
    %v2089 = vand.u32 %v112, 4294901760
    %2090 = vmatpush.msra.mxu0 %v2089
    %v2091 = vand.u32 %v111, 4294901760
    %2092 = vmatpush.msra.mxu0 %v2091
    %v2093 = vand.u32 %v110, 4294901760
    %2094 = vmatpush.msra.mxu0 %v2093
    %v2095 = vand.u32 %v109, 4294901760
    %2096 = vmatpush.msra.mxu0 %v2095
    %v2097 = vand.u32 %v108, 4294901760
    %2098 = vmatpush.msra.mxu0 %v2097
    %v2099 = vand.u32 %v107, 4294901760
    %2100 = vmatpush.msra.mxu0 %v2099
    %v2101 = vand.u32 %v106, 4294901760
    %2102 = vmatpush.msra.mxu0 %v2101
    %v2103 = vand.u32 %v105, 4294901760
    %2104 = vmatpush.msra.mxu0 %v2103
    %v2105 = vand.u32 %v104, 4294901760
    %2106 = vmatpush.msra.mxu0 %v2105
    %v2107 = vand.u32 %v103, 4294901760
    %2108 = vmatpush.msra.mxu0 %v2107
    %v2109 = vand.u32 %v165, 4294901760
    %v2110 = vsub.f32 %v165, %v2109
    %v2111 = vand.u32 %v2110, 4294901760
    %2112 = vmatmul.f32.gmra.mxu0 %v2111
    %v2113 = vpop.f32.mrf.mxu0
    %v2114 = vadd.f32 %v2075, %v2113
    %2115 = vdwg.mxu0
    %v2116 = vand.u32 %v118, 4294901760
    %v2117 = vsub.f32 %v118, %v2116
    %v2118 = vand.u32 %v2117, 4294901760
    %2119 = vmatpush.msra.mxu0 %v2118
    %v2120 = vand.u32 %v117, 4294901760
    %v2121 = vsub.f32 %v117, %v2120
    %v2122 = vand.u32 %v2121, 4294901760
    %2123 = vmatpush.msra.mxu0 %v2122
    %v2124 = vand.u32 %v116, 4294901760
    %v2125 = vsub.f32 %v116, %v2124
    %v2126 = vand.u32 %v2125, 4294901760
    %2127 = vmatpush.msra.mxu0 %v2126
    %v2128 = vand.u32 %v115, 4294901760
    %v2129 = vsub.f32 %v115, %v2128
    %v2130 = vand.u32 %v2129, 4294901760
    %2131 = vmatpush.msra.mxu0 %v2130
    %v2132 = vand.u32 %v114, 4294901760
    %v2133 = vsub.f32 %v114, %v2132
    %v2134 = vand.u32 %v2133, 4294901760
    %2135 = vmatpush.msra.mxu0 %v2134
    %v2136 = vand.u32 %v113, 4294901760
    %v2137 = vsub.f32 %v113, %v2136
    %v2138 = vand.u32 %v2137, 4294901760
    %2139 = vmatpush.msra.mxu0 %v2138
    %v2140 = vand.u32 %v112, 4294901760
    %v2141 = vsub.f32 %v112, %v2140
    %v2142 = vand.u32 %v2141, 4294901760
    %2143 = vmatpush.msra.mxu0 %v2142
    %v2144 = vand.u32 %v111, 4294901760
    %v2145 = vsub.f32 %v111, %v2144
    %v2146 = vand.u32 %v2145, 4294901760
    %2147 = vmatpush.msra.mxu0 %v2146
    %v2148 = vand.u32 %v110, 4294901760
    %v2149 = vsub.f32 %v110, %v2148
    %v2150 = vand.u32 %v2149, 4294901760
    %2151 = vmatpush.msra.mxu0 %v2150
    %v2152 = vand.u32 %v109, 4294901760
    %v2153 = vsub.f32 %v109, %v2152
    %v2154 = vand.u32 %v2153, 4294901760
    %2155 = vmatpush.msra.mxu0 %v2154
    %v2156 = vand.u32 %v108, 4294901760
    %v2157 = vsub.f32 %v108, %v2156
    %v2158 = vand.u32 %v2157, 4294901760
    %2159 = vmatpush.msra.mxu0 %v2158
    %v2160 = vand.u32 %v107, 4294901760
    %v2161 = vsub.f32 %v107, %v2160
    %v2162 = vand.u32 %v2161, 4294901760
    %2163 = vmatpush.msra.mxu0 %v2162
    %v2164 = vand.u32 %v106, 4294901760
    %v2165 = vsub.f32 %v106, %v2164
    %v2166 = vand.u32 %v2165, 4294901760
    %2167 = vmatpush.msra.mxu0 %v2166
    %v2168 = vand.u32 %v105, 4294901760
    %v2169 = vsub.f32 %v105, %v2168
    %v2170 = vand.u32 %v2169, 4294901760
    %2171 = vmatpush.msra.mxu0 %v2170
    %v2172 = vand.u32 %v104, 4294901760
    %v2173 = vsub.f32 %v104, %v2172
    %v2174 = vand.u32 %v2173, 4294901760
    %2175 = vmatpush.msra.mxu0 %v2174
    %v2176 = vand.u32 %v103, 4294901760
    %v2177 = vsub.f32 %v103, %v2176
    %v2178 = vand.u32 %v2177, 4294901760
    %2179 = vmatpush.msra.mxu0 %v2178
    %v2180 = vand.u32 %v165, 4294901760
    %2181 = vmatmul.f32.gmra.mxu0 %v2180
    %v2182 = vpop.f32.mrf.mxu0
    %v2183 = vadd.f32 %v2114, %v2182
    %2184 = vdwg.mxu0
    %v2185 = vand.u32 %v118, 4294901760
    %2186 = vmatpush.msra.mxu0 %v2185
    %v2187 = vand.u32 %v117, 4294901760
    %2188 = vmatpush.msra.mxu0 %v2187
    %v2189 = vand.u32 %v116, 4294901760
    %2190 = vmatpush.msra.mxu0 %v2189
    %v2191 = vand.u32 %v115, 4294901760
    %2192 = vmatpush.msra.mxu0 %v2191
    %v2193 = vand.u32 %v114, 4294901760
    %2194 = vmatpush.msra.mxu0 %v2193
    %v2195 = vand.u32 %v113, 4294901760
    %2196 = vmatpush.msra.mxu0 %v2195
    %v2197 = vand.u32 %v112, 4294901760
    %2198 = vmatpush.msra.mxu0 %v2197
    %v2199 = vand.u32 %v111, 4294901760
    %2200 = vmatpush.msra.mxu0 %v2199
    %v2201 = vand.u32 %v110, 4294901760
    %2202 = vmatpush.msra.mxu0 %v2201
    %v2203 = vand.u32 %v109, 4294901760
    %2204 = vmatpush.msra.mxu0 %v2203
    %v2205 = vand.u32 %v108, 4294901760
    %2206 = vmatpush.msra.mxu0 %v2205
    %v2207 = vand.u32 %v107, 4294901760
    %2208 = vmatpush.msra.mxu0 %v2207
    %v2209 = vand.u32 %v106, 4294901760
    %2210 = vmatpush.msra.mxu0 %v2209
    %v2211 = vand.u32 %v105, 4294901760
    %2212 = vmatpush.msra.mxu0 %v2211
    %v2213 = vand.u32 %v104, 4294901760
    %2214 = vmatpush.msra.mxu0 %v2213
    %v2215 = vand.u32 %v103, 4294901760
    %2216 = vmatpush.msra.mxu0 %v2215
    %v2217 = vand.u32 %v165, 4294901760
    %2218 = vmatmul.f32.gmra.mxu0 %v2217
    %v2219 = vpop.f32.mrf.mxu0
    %v2220 = vadd.f32 %v2183, %v2219
    %2221 = vdwg.mxu0
    %v2222 = vand.u32 %v134, 4294901760
    %2223 = vmatpush.msra.mxu0 %v2222
    %v2224 = vand.u32 %v133, 4294901760
    %2225 = vmatpush.msra.mxu0 %v2224
    %v2226 = vand.u32 %v132, 4294901760
    %2227 = vmatpush.msra.mxu0 %v2226
    %v2228 = vand.u32 %v131, 4294901760
    %2229 = vmatpush.msra.mxu0 %v2228
    %v2230 = vand.u32 %v130, 4294901760
    %2231 = vmatpush.msra.mxu0 %v2230
    %v2232 = vand.u32 %v129, 4294901760
    %2233 = vmatpush.msra.mxu0 %v2232
    %v2234 = vand.u32 %v128, 4294901760
    %2235 = vmatpush.msra.mxu0 %v2234
    %v2236 = vand.u32 %v127, 4294901760
    %2237 = vmatpush.msra.mxu0 %v2236
    %v2238 = vand.u32 %v126, 4294901760
    %2239 = vmatpush.msra.mxu0 %v2238
    %v2240 = vand.u32 %v125, 4294901760
    %2241 = vmatpush.msra.mxu0 %v2240
    %v2242 = vand.u32 %v124, 4294901760
    %2243 = vmatpush.msra.mxu0 %v2242
    %v2244 = vand.u32 %v123, 4294901760
    %2245 = vmatpush.msra.mxu0 %v2244
    %v2246 = vand.u32 %v122, 4294901760
    %2247 = vmatpush.msra.mxu0 %v2246
    %v2248 = vand.u32 %v121, 4294901760
    %2249 = vmatpush.msra.mxu0 %v2248
    %v2250 = vand.u32 %v120, 4294901760
    %2251 = vmatpush.msra.mxu0 %v2250
    %v2252 = vand.u32 %v119, 4294901760
    %2253 = vmatpush.msra.mxu0 %v2252
    %v2254 = vand.u32 %v166, 4294901760
    %v2255 = vsub.f32 %v166, %v2254
    %v2256 = vand.u32 %v2255, 4294901760
    %v2257 = vsub.f32 %v2255, %v2256
    %v2258 = vand.u32 %v2257, 4294901760
    %2259 = vmatmul.f32.gmra.mxu0 %v2258
    %v2260 = vpop.f32.mrf.mxu0
    %v2261 = vadd.f32 %v2220, %v2260
    %2262 = vdwg.mxu0
    %v2263 = vand.u32 %v134, 4294901760
    %v2264 = vsub.f32 %v134, %v2263
    %v2265 = vand.u32 %v2264, 4294901760
    %v2266 = vsub.f32 %v2264, %v2265
    %v2267 = vand.u32 %v2266, 4294901760
    %2268 = vmatpush.msra.mxu0 %v2267
    %v2269 = vand.u32 %v133, 4294901760
    %v2270 = vsub.f32 %v133, %v2269
    %v2271 = vand.u32 %v2270, 4294901760
    %v2272 = vsub.f32 %v2270, %v2271
    %v2273 = vand.u32 %v2272, 4294901760
    %2274 = vmatpush.msra.mxu0 %v2273
    %v2275 = vand.u32 %v132, 4294901760
    %v2276 = vsub.f32 %v132, %v2275
    %v2277 = vand.u32 %v2276, 4294901760
    %v2278 = vsub.f32 %v2276, %v2277
    %v2279 = vand.u32 %v2278, 4294901760
    %2280 = vmatpush.msra.mxu0 %v2279
    %v2281 = vand.u32 %v131, 4294901760
    %v2282 = vsub.f32 %v131, %v2281
    %v2283 = vand.u32 %v2282, 4294901760
    %v2284 = vsub.f32 %v2282, %v2283
    %v2285 = vand.u32 %v2284, 4294901760
    %2286 = vmatpush.msra.mxu0 %v2285
    %v2287 = vand.u32 %v130, 4294901760
    %v2288 = vsub.f32 %v130, %v2287
    %v2289 = vand.u32 %v2288, 4294901760
    %v2290 = vsub.f32 %v2288, %v2289
    %v2291 = vand.u32 %v2290, 4294901760
    %2292 = vmatpush.msra.mxu0 %v2291
    %v2293 = vand.u32 %v129, 4294901760
    %v2294 = vsub.f32 %v129, %v2293
    %v2295 = vand.u32 %v2294, 4294901760
    %v2296 = vsub.f32 %v2294, %v2295
    %v2297 = vand.u32 %v2296, 4294901760
    %2298 = vmatpush.msra.mxu0 %v2297
    %v2299 = vand.u32 %v128, 4294901760
    %v2300 = vsub.f32 %v128, %v2299
    %v2301 = vand.u32 %v2300, 4294901760
    %v2302 = vsub.f32 %v2300, %v2301
    %v2303 = vand.u32 %v2302, 4294901760
    %2304 = vmatpush.msra.mxu0 %v2303
    %v2305 = vand.u32 %v127, 4294901760
    %v2306 = vsub.f32 %v127, %v2305
    %v2307 = vand.u32 %v2306, 4294901760
    %v2308 = vsub.f32 %v2306, %v2307
    %v2309 = vand.u32 %v2308, 4294901760
    %2310 = vmatpush.msra.mxu0 %v2309
    %v2311 = vand.u32 %v126, 4294901760
    %v2312 = vsub.f32 %v126, %v2311
    %v2313 = vand.u32 %v2312, 4294901760
    %v2314 = vsub.f32 %v2312, %v2313
    %v2315 = vand.u32 %v2314, 4294901760
    %2316 = vmatpush.msra.mxu0 %v2315
    %v2317 = vand.u32 %v125, 4294901760
    %v2318 = vsub.f32 %v125, %v2317
    %v2319 = vand.u32 %v2318, 4294901760
    %v2320 = vsub.f32 %v2318, %v2319
    %v2321 = vand.u32 %v2320, 4294901760
    %2322 = vmatpush.msra.mxu0 %v2321
    %v2323 = vand.u32 %v124, 4294901760
    %v2324 = vsub.f32 %v124, %v2323
    %v2325 = vand.u32 %v2324, 4294901760
    %v2326 = vsub.f32 %v2324, %v2325
    %v2327 = vand.u32 %v2326, 4294901760
    %2328 = vmatpush.msra.mxu0 %v2327
    %v2329 = vand.u32 %v123, 4294901760
    %v2330 = vsub.f32 %v123, %v2329
    %v2331 = vand.u32 %v2330, 4294901760
    %v2332 = vsub.f32 %v2330, %v2331
    %v2333 = vand.u32 %v2332, 4294901760
    %2334 = vmatpush.msra.mxu0 %v2333
    %v2335 = vand.u32 %v122, 4294901760
    %v2336 = vsub.f32 %v122, %v2335
    %v2337 = vand.u32 %v2336, 4294901760
    %v2338 = vsub.f32 %v2336, %v2337
    %v2339 = vand.u32 %v2338, 4294901760
    %2340 = vmatpush.msra.mxu0 %v2339
    %v2341 = vand.u32 %v121, 4294901760
    %v2342 = vsub.f32 %v121, %v2341
    %v2343 = vand.u32 %v2342, 4294901760
    %v2344 = vsub.f32 %v2342, %v2343
    %v2345 = vand.u32 %v2344, 4294901760
    %2346 = vmatpush.msra.mxu0 %v2345
    %v2347 = vand.u32 %v120, 4294901760
    %v2348 = vsub.f32 %v120, %v2347
    %v2349 = vand.u32 %v2348, 4294901760
    %v2350 = vsub.f32 %v2348, %v2349
    %v2351 = vand.u32 %v2350, 4294901760
    %2352 = vmatpush.msra.mxu0 %v2351
    %v2353 = vand.u32 %v119, 4294901760
    %v2354 = vsub.f32 %v119, %v2353
    %v2355 = vand.u32 %v2354, 4294901760
    %v2356 = vsub.f32 %v2354, %v2355
    %v2357 = vand.u32 %v2356, 4294901760
    %2358 = vmatpush.msra.mxu0 %v2357
    %v2359 = vand.u32 %v166, 4294901760
    %2360 = vmatmul.f32.gmra.mxu0 %v2359
    %v2361 = vpop.f32.mrf.mxu0
    %v2362 = vadd.f32 %v2261, %v2361
    %2363 = vdwg.mxu0
    %v2364 = vand.u32 %v134, 4294901760
    %v2365 = vsub.f32 %v134, %v2364
    %2366 = vmatpush.msra.mxu0 %v2365
    %v2367 = vand.u32 %v133, 4294901760
    %v2368 = vsub.f32 %v133, %v2367
    %2369 = vmatpush.msra.mxu0 %v2368
    %v2370 = vand.u32 %v132, 4294901760
    %v2371 = vsub.f32 %v132, %v2370
    %2372 = vmatpush.msra.mxu0 %v2371
    %v2373 = vand.u32 %v131, 4294901760
    %v2374 = vsub.f32 %v131, %v2373
    %2375 = vmatpush.msra.mxu0 %v2374
    %v2376 = vand.u32 %v130, 4294901760
    %v2377 = vsub.f32 %v130, %v2376
    %2378 = vmatpush.msra.mxu0 %v2377
    %v2379 = vand.u32 %v129, 4294901760
    %v2380 = vsub.f32 %v129, %v2379
    %2381 = vmatpush.msra.mxu0 %v2380
    %v2382 = vand.u32 %v128, 4294901760
    %v2383 = vsub.f32 %v128, %v2382
    %2384 = vmatpush.msra.mxu0 %v2383
    %v2385 = vand.u32 %v127, 4294901760
    %v2386 = vsub.f32 %v127, %v2385
    %2387 = vmatpush.msra.mxu0 %v2386
    %v2388 = vand.u32 %v126, 4294901760
    %v2389 = vsub.f32 %v126, %v2388
    %2390 = vmatpush.msra.mxu0 %v2389
    %v2391 = vand.u32 %v125, 4294901760
    %v2392 = vsub.f32 %v125, %v2391
    %2393 = vmatpush.msra.mxu0 %v2392
    %v2394 = vand.u32 %v124, 4294901760
    %v2395 = vsub.f32 %v124, %v2394
    %2396 = vmatpush.msra.mxu0 %v2395
    %v2397 = vand.u32 %v123, 4294901760
    %v2398 = vsub.f32 %v123, %v2397
    %2399 = vmatpush.msra.mxu0 %v2398
    %v2400 = vand.u32 %v122, 4294901760
    %v2401 = vsub.f32 %v122, %v2400
    %2402 = vmatpush.msra.mxu0 %v2401
    %v2403 = vand.u32 %v121, 4294901760
    %v2404 = vsub.f32 %v121, %v2403
    %2405 = vmatpush.msra.mxu0 %v2404
    %v2406 = vand.u32 %v120, 4294901760
    %v2407 = vsub.f32 %v120, %v2406
    %2408 = vmatpush.msra.mxu0 %v2407
    %v2409 = vand.u32 %v119, 4294901760
    %v2410 = vsub.f32 %v119, %v2409
    %2411 = vmatpush.msra.mxu0 %v2410
    %v2412 = vand.u32 %v166, 4294901760
    %v2413 = vsub.f32 %v166, %v2412
    %2414 = vmatmul.f32.gmra.mxu0 %v2413
    %v2415 = vpop.f32.mrf.mxu0
    %v2416 = vadd.f32 %v2362, %v2415
    %2417 = vdwg.mxu0
    %v2418 = vand.u32 %v134, 4294901760
    %2419 = vmatpush.msra.mxu0 %v2418
    %v2420 = vand.u32 %v133, 4294901760
    %2421 = vmatpush.msra.mxu0 %v2420
    %v2422 = vand.u32 %v132, 4294901760
    %2423 = vmatpush.msra.mxu0 %v2422
    %v2424 = vand.u32 %v131, 4294901760
    %2425 = vmatpush.msra.mxu0 %v2424
    %v2426 = vand.u32 %v130, 4294901760
    %2427 = vmatpush.msra.mxu0 %v2426
    %v2428 = vand.u32 %v129, 4294901760
    %2429 = vmatpush.msra.mxu0 %v2428
    %v2430 = vand.u32 %v128, 4294901760
    %2431 = vmatpush.msra.mxu0 %v2430
    %v2432 = vand.u32 %v127, 4294901760
    %2433 = vmatpush.msra.mxu0 %v2432
    %v2434 = vand.u32 %v126, 4294901760
    %2435 = vmatpush.msra.mxu0 %v2434
    %v2436 = vand.u32 %v125, 4294901760
    %2437 = vmatpush.msra.mxu0 %v2436
    %v2438 = vand.u32 %v124, 4294901760
    %2439 = vmatpush.msra.mxu0 %v2438
    %v2440 = vand.u32 %v123, 4294901760
    %2441 = vmatpush.msra.mxu0 %v2440
    %v2442 = vand.u32 %v122, 4294901760
    %2443 = vmatpush.msra.mxu0 %v2442
    %v2444 = vand.u32 %v121, 4294901760
    %2445 = vmatpush.msra.mxu0 %v2444
    %v2446 = vand.u32 %v120, 4294901760
    %2447 = vmatpush.msra.mxu0 %v2446
    %v2448 = vand.u32 %v119, 4294901760
    %2449 = vmatpush.msra.mxu0 %v2448
    %v2450 = vand.u32 %v166, 4294901760
    %v2451 = vsub.f32 %v166, %v2450
    %v2452 = vand.u32 %v2451, 4294901760
    %2453 = vmatmul.f32.gmra.mxu0 %v2452
    %v2454 = vpop.f32.mrf.mxu0
    %v2455 = vadd.f32 %v2416, %v2454
    %2456 = vdwg.mxu0
    %v2457 = vand.u32 %v134, 4294901760
    %v2458 = vsub.f32 %v134, %v2457
    %v2459 = vand.u32 %v2458, 4294901760
    %2460 = vmatpush.msra.mxu0 %v2459
    %v2461 = vand.u32 %v133, 4294901760
    %v2462 = vsub.f32 %v133, %v2461
    %v2463 = vand.u32 %v2462, 4294901760
    %2464 = vmatpush.msra.mxu0 %v2463
    %v2465 = vand.u32 %v132, 4294901760
    %v2466 = vsub.f32 %v132, %v2465
    %v2467 = vand.u32 %v2466, 4294901760
    %2468 = vmatpush.msra.mxu0 %v2467
    %v2469 = vand.u32 %v131, 4294901760
    %v2470 = vsub.f32 %v131, %v2469
    %v2471 = vand.u32 %v2470, 4294901760
    %2472 = vmatpush.msra.mxu0 %v2471
    %v2473 = vand.u32 %v130, 4294901760
    %v2474 = vsub.f32 %v130, %v2473
    %v2475 = vand.u32 %v2474, 4294901760
    %2476 = vmatpush.msra.mxu0 %v2475
    %v2477 = vand.u32 %v129, 4294901760
    %v2478 = vsub.f32 %v129, %v2477
    %v2479 = vand.u32 %v2478, 4294901760
    %2480 = vmatpush.msra.mxu0 %v2479
    %v2481 = vand.u32 %v128, 4294901760
    %v2482 = vsub.f32 %v128, %v2481
    %v2483 = vand.u32 %v2482, 4294901760
    %2484 = vmatpush.msra.mxu0 %v2483
    %v2485 = vand.u32 %v127, 4294901760
    %v2486 = vsub.f32 %v127, %v2485
    %v2487 = vand.u32 %v2486, 4294901760
    %2488 = vmatpush.msra.mxu0 %v2487
    %v2489 = vand.u32 %v126, 4294901760
    %v2490 = vsub.f32 %v126, %v2489
    %v2491 = vand.u32 %v2490, 4294901760
    %2492 = vmatpush.msra.mxu0 %v2491
    %v2493 = vand.u32 %v125, 4294901760
    %v2494 = vsub.f32 %v125, %v2493
    %v2495 = vand.u32 %v2494, 4294901760
    %2496 = vmatpush.msra.mxu0 %v2495
    %v2497 = vand.u32 %v124, 4294901760
    %v2498 = vsub.f32 %v124, %v2497
    %v2499 = vand.u32 %v2498, 4294901760
    %2500 = vmatpush.msra.mxu0 %v2499
    %v2501 = vand.u32 %v123, 4294901760
    %v2502 = vsub.f32 %v123, %v2501
    %v2503 = vand.u32 %v2502, 4294901760
    %2504 = vmatpush.msra.mxu0 %v2503
    %v2505 = vand.u32 %v122, 4294901760
    %v2506 = vsub.f32 %v122, %v2505
    %v2507 = vand.u32 %v2506, 4294901760
    %2508 = vmatpush.msra.mxu0 %v2507
    %v2509 = vand.u32 %v121, 4294901760
    %v2510 = vsub.f32 %v121, %v2509
    %v2511 = vand.u32 %v2510, 4294901760
    %2512 = vmatpush.msra.mxu0 %v2511
    %v2513 = vand.u32 %v120, 4294901760
    %v2514 = vsub.f32 %v120, %v2513
    %v2515 = vand.u32 %v2514, 4294901760
    %2516 = vmatpush.msra.mxu0 %v2515
    %v2517 = vand.u32 %v119, 4294901760
    %v2518 = vsub.f32 %v119, %v2517
    %v2519 = vand.u32 %v2518, 4294901760
    %2520 = vmatpush.msra.mxu0 %v2519
    %v2521 = vand.u32 %v166, 4294901760
    %2522 = vmatmul.f32.gmra.mxu0 %v2521
    %v2523 = vpop.f32.mrf.mxu0
    %v2524 = vadd.f32 %v2455, %v2523
    %2525 = vdwg.mxu0
    %v2526 = vand.u32 %v134, 4294901760
    %2527 = vmatpush.msra.mxu0 %v2526
    %v2528 = vand.u32 %v133, 4294901760
    %2529 = vmatpush.msra.mxu0 %v2528
    %v2530 = vand.u32 %v132, 4294901760
    %2531 = vmatpush.msra.mxu0 %v2530
    %v2532 = vand.u32 %v131, 4294901760
    %2533 = vmatpush.msra.mxu0 %v2532
    %v2534 = vand.u32 %v130, 4294901760
    %2535 = vmatpush.msra.mxu0 %v2534
    %v2536 = vand.u32 %v129, 4294901760
    %2537 = vmatpush.msra.mxu0 %v2536
    %v2538 = vand.u32 %v128, 4294901760
    %2539 = vmatpush.msra.mxu0 %v2538
    %v2540 = vand.u32 %v127, 4294901760
    %2541 = vmatpush.msra.mxu0 %v2540
    %v2542 = vand.u32 %v126, 4294901760
    %2543 = vmatpush.msra.mxu0 %v2542
    %v2544 = vand.u32 %v125, 4294901760
    %2545 = vmatpush.msra.mxu0 %v2544
    %v2546 = vand.u32 %v124, 4294901760
    %2547 = vmatpush.msra.mxu0 %v2546
    %v2548 = vand.u32 %v123, 4294901760
    %2549 = vmatpush.msra.mxu0 %v2548
    %v2550 = vand.u32 %v122, 4294901760
    %2551 = vmatpush.msra.mxu0 %v2550
    %v2552 = vand.u32 %v121, 4294901760
    %2553 = vmatpush.msra.mxu0 %v2552
    %v2554 = vand.u32 %v120, 4294901760
    %2555 = vmatpush.msra.mxu0 %v2554
    %v2556 = vand.u32 %v119, 4294901760
    %2557 = vmatpush.msra.mxu0 %v2556
    %v2558 = vand.u32 %v166, 4294901760
    %2559 = vmatmul.f32.gmra.mxu0 %v2558
    %v2560 = vpop.f32.mrf.mxu0
    %v2561 = vadd.f32 %v2524, %v2560
    %2562 = vdwg.mxu0
    %v2563 = vand.u32 %v150, 4294901760
    %2564 = vmatpush.msra.mxu0 %v2563
    %v2565 = vand.u32 %v149, 4294901760
    %2566 = vmatpush.msra.mxu0 %v2565
    %v2567 = vand.u32 %v148, 4294901760
    %2568 = vmatpush.msra.mxu0 %v2567
    %v2569 = vand.u32 %v147, 4294901760
    %2570 = vmatpush.msra.mxu0 %v2569
    %v2571 = vand.u32 %v146, 4294901760
    %2572 = vmatpush.msra.mxu0 %v2571
    %v2573 = vand.u32 %v145, 4294901760
    %2574 = vmatpush.msra.mxu0 %v2573
    %v2575 = vand.u32 %v144, 4294901760
    %2576 = vmatpush.msra.mxu0 %v2575
    %v2577 = vand.u32 %v143, 4294901760
    %2578 = vmatpush.msra.mxu0 %v2577
    %v2579 = vand.u32 %v142, 4294901760
    %2580 = vmatpush.msra.mxu0 %v2579
    %v2581 = vand.u32 %v141, 4294901760
    %2582 = vmatpush.msra.mxu0 %v2581
    %v2583 = vand.u32 %v140, 4294901760
    %2584 = vmatpush.msra.mxu0 %v2583
    %v2585 = vand.u32 %v139, 4294901760
    %2586 = vmatpush.msra.mxu0 %v2585
    %v2587 = vand.u32 %v138, 4294901760
    %2588 = vmatpush.msra.mxu0 %v2587
    %v2589 = vand.u32 %v137, 4294901760
    %2590 = vmatpush.msra.mxu0 %v2589
    %v2591 = vand.u32 %v136, 4294901760
    %2592 = vmatpush.msra.mxu0 %v2591
    %v2593 = vand.u32 %v135, 4294901760
    %2594 = vmatpush.msra.mxu0 %v2593
    %v2595 = vand.u32 %v167, 4294901760
    %v2596 = vsub.f32 %v167, %v2595
    %v2597 = vand.u32 %v2596, 4294901760
    %v2598 = vsub.f32 %v2596, %v2597
    %v2599 = vand.u32 %v2598, 4294901760
    %2600 = vmatmul.f32.gmra.mxu0 %v2599
    %v2601 = vpop.f32.mrf.mxu0
    %v2602 = vadd.f32 %v2561, %v2601
    %2603 = vdwg.mxu0
    %v2604 = vand.u32 %v150, 4294901760
    %v2605 = vsub.f32 %v150, %v2604
    %v2606 = vand.u32 %v2605, 4294901760
    %v2607 = vsub.f32 %v2605, %v2606
    %v2608 = vand.u32 %v2607, 4294901760
    %2609 = vmatpush.msra.mxu0 %v2608
    %v2610 = vand.u32 %v149, 4294901760
    %v2611 = vsub.f32 %v149, %v2610
    %v2612 = vand.u32 %v2611, 4294901760
    %v2613 = vsub.f32 %v2611, %v2612
    %v2614 = vand.u32 %v2613, 4294901760
    %2615 = vmatpush.msra.mxu0 %v2614
    %v2616 = vand.u32 %v148, 4294901760
    %v2617 = vsub.f32 %v148, %v2616
    %v2618 = vand.u32 %v2617, 4294901760
    %v2619 = vsub.f32 %v2617, %v2618
    %v2620 = vand.u32 %v2619, 4294901760
    %2621 = vmatpush.msra.mxu0 %v2620
    %v2622 = vand.u32 %v147, 4294901760
    %v2623 = vsub.f32 %v147, %v2622
    %v2624 = vand.u32 %v2623, 4294901760
    %v2625 = vsub.f32 %v2623, %v2624
    %v2626 = vand.u32 %v2625, 4294901760
    %2627 = vmatpush.msra.mxu0 %v2626
    %v2628 = vand.u32 %v146, 4294901760
    %v2629 = vsub.f32 %v146, %v2628
    %v2630 = vand.u32 %v2629, 4294901760
    %v2631 = vsub.f32 %v2629, %v2630
    %v2632 = vand.u32 %v2631, 4294901760
    %2633 = vmatpush.msra.mxu0 %v2632
    %v2634 = vand.u32 %v145, 4294901760
    %v2635 = vsub.f32 %v145, %v2634
    %v2636 = vand.u32 %v2635, 4294901760
    %v2637 = vsub.f32 %v2635, %v2636
    %v2638 = vand.u32 %v2637, 4294901760
    %2639 = vmatpush.msra.mxu0 %v2638
    %v2640 = vand.u32 %v144, 4294901760
    %v2641 = vsub.f32 %v144, %v2640
    %v2642 = vand.u32 %v2641, 4294901760
    %v2643 = vsub.f32 %v2641, %v2642
    %v2644 = vand.u32 %v2643, 4294901760
    %2645 = vmatpush.msra.mxu0 %v2644
    %v2646 = vand.u32 %v143, 4294901760
    %v2647 = vsub.f32 %v143, %v2646
    %v2648 = vand.u32 %v2647, 4294901760
    %v2649 = vsub.f32 %v2647, %v2648
    %v2650 = vand.u32 %v2649, 4294901760
    %2651 = vmatpush.msra.mxu0 %v2650
    %v2652 = vand.u32 %v142, 4294901760
    %v2653 = vsub.f32 %v142, %v2652
    %v2654 = vand.u32 %v2653, 4294901760
    %v2655 = vsub.f32 %v2653, %v2654
    %v2656 = vand.u32 %v2655, 4294901760
    %2657 = vmatpush.msra.mxu0 %v2656
    %v2658 = vand.u32 %v141, 4294901760
    %v2659 = vsub.f32 %v141, %v2658
    %v2660 = vand.u32 %v2659, 4294901760
    %v2661 = vsub.f32 %v2659, %v2660
    %v2662 = vand.u32 %v2661, 4294901760
    %2663 = vmatpush.msra.mxu0 %v2662
    %v2664 = vand.u32 %v140, 4294901760
    %v2665 = vsub.f32 %v140, %v2664
    %v2666 = vand.u32 %v2665, 4294901760
    %v2667 = vsub.f32 %v2665, %v2666
    %v2668 = vand.u32 %v2667, 4294901760
    %2669 = vmatpush.msra.mxu0 %v2668
    %v2670 = vand.u32 %v139, 4294901760
    %v2671 = vsub.f32 %v139, %v2670
    %v2672 = vand.u32 %v2671, 4294901760
    %v2673 = vsub.f32 %v2671, %v2672
    %v2674 = vand.u32 %v2673, 4294901760
    %2675 = vmatpush.msra.mxu0 %v2674
    %v2676 = vand.u32 %v138, 4294901760
    %v2677 = vsub.f32 %v138, %v2676
    %v2678 = vand.u32 %v2677, 4294901760
    %v2679 = vsub.f32 %v2677, %v2678
    %v2680 = vand.u32 %v2679, 4294901760
    %2681 = vmatpush.msra.mxu0 %v2680
    %v2682 = vand.u32 %v137, 4294901760
    %v2683 = vsub.f32 %v137, %v2682
    %v2684 = vand.u32 %v2683, 4294901760
    %v2685 = vsub.f32 %v2683, %v2684
    %v2686 = vand.u32 %v2685, 4294901760
    %2687 = vmatpush.msra.mxu0 %v2686
    %v2688 = vand.u32 %v136, 4294901760
    %v2689 = vsub.f32 %v136, %v2688
    %v2690 = vand.u32 %v2689, 4294901760
    %v2691 = vsub.f32 %v2689, %v2690
    %v2692 = vand.u32 %v2691, 4294901760
    %2693 = vmatpush.msra.mxu0 %v2692
    %v2694 = vand.u32 %v135, 4294901760
    %v2695 = vsub.f32 %v135, %v2694
    %v2696 = vand.u32 %v2695, 4294901760
    %v2697 = vsub.f32 %v2695, %v2696
    %v2698 = vand.u32 %v2697, 4294901760
    %2699 = vmatpush.msra.mxu0 %v2698
    %v2700 = vand.u32 %v167, 4294901760
    %2701 = vmatmul.f32.gmra.mxu0 %v2700
    %v2702 = vpop.f32.mrf.mxu0
    %v2703 = vadd.f32 %v2602, %v2702
    %2704 = vdwg.mxu0
    %v2705 = vand.u32 %v150, 4294901760
    %v2706 = vsub.f32 %v150, %v2705
    %2707 = vmatpush.msra.mxu0 %v2706
    %v2708 = vand.u32 %v149, 4294901760
    %v2709 = vsub.f32 %v149, %v2708
    %2710 = vmatpush.msra.mxu0 %v2709
    %v2711 = vand.u32 %v148, 4294901760
    %v2712 = vsub.f32 %v148, %v2711
    %2713 = vmatpush.msra.mxu0 %v2712
    %v2714 = vand.u32 %v147, 4294901760
    %v2715 = vsub.f32 %v147, %v2714
    %2716 = vmatpush.msra.mxu0 %v2715
    %v2717 = vand.u32 %v146, 4294901760
    %v2718 = vsub.f32 %v146, %v2717
    %2719 = vmatpush.msra.mxu0 %v2718
    %v2720 = vand.u32 %v145, 4294901760
    %v2721 = vsub.f32 %v145, %v2720
    %2722 = vmatpush.msra.mxu0 %v2721
    %v2723 = vand.u32 %v144, 4294901760
    %v2724 = vsub.f32 %v144, %v2723
    %2725 = vmatpush.msra.mxu0 %v2724
    %v2726 = vand.u32 %v143, 4294901760
    %v2727 = vsub.f32 %v143, %v2726
    %2728 = vmatpush.msra.mxu0 %v2727
    %v2729 = vand.u32 %v142, 4294901760
    %v2730 = vsub.f32 %v142, %v2729
    %2731 = vmatpush.msra.mxu0 %v2730
    %v2732 = vand.u32 %v141, 4294901760
    %v2733 = vsub.f32 %v141, %v2732
    %2734 = vmatpush.msra.mxu0 %v2733
    %v2735 = vand.u32 %v140, 4294901760
    %v2736 = vsub.f32 %v140, %v2735
    %2737 = vmatpush.msra.mxu0 %v2736
    %v2738 = vand.u32 %v139, 4294901760
    %v2739 = vsub.f32 %v139, %v2738
    %2740 = vmatpush.msra.mxu0 %v2739
    %v2741 = vand.u32 %v138, 4294901760
    %v2742 = vsub.f32 %v138, %v2741
    %2743 = vmatpush.msra.mxu0 %v2742
    %v2744 = vand.u32 %v137, 4294901760
    %v2745 = vsub.f32 %v137, %v2744
    %2746 = vmatpush.msra.mxu0 %v2745
    %v2747 = vand.u32 %v136, 4294901760
    %v2748 = vsub.f32 %v136, %v2747
    %2749 = vmatpush.msra.mxu0 %v2748
    %v2750 = vand.u32 %v135, 4294901760
    %v2751 = vsub.f32 %v135, %v2750
    %2752 = vmatpush.msra.mxu0 %v2751
    %v2753 = vand.u32 %v167, 4294901760
    %v2754 = vsub.f32 %v167, %v2753
    %2755 = vmatmul.f32.gmra.mxu0 %v2754
    %v2756 = vpop.f32.mrf.mxu0
    %v2757 = vadd.f32 %v2703, %v2756
    %2758 = vdwg.mxu0
    %v2759 = vand.u32 %v150, 4294901760
    %2760 = vmatpush.msra.mxu0 %v2759
    %v2761 = vand.u32 %v149, 4294901760
    %2762 = vmatpush.msra.mxu0 %v2761
    %v2763 = vand.u32 %v148, 4294901760
    %2764 = vmatpush.msra.mxu0 %v2763
    %v2765 = vand.u32 %v147, 4294901760
    %2766 = vmatpush.msra.mxu0 %v2765
    %v2767 = vand.u32 %v146, 4294901760
    %2768 = vmatpush.msra.mxu0 %v2767
    %v2769 = vand.u32 %v145, 4294901760
    %2770 = vmatpush.msra.mxu0 %v2769
    %v2771 = vand.u32 %v144, 4294901760
    %2772 = vmatpush.msra.mxu0 %v2771
    %v2773 = vand.u32 %v143, 4294901760
    %2774 = vmatpush.msra.mxu0 %v2773
    %v2775 = vand.u32 %v142, 4294901760
    %2776 = vmatpush.msra.mxu0 %v2775
    %v2777 = vand.u32 %v141, 4294901760
    %2778 = vmatpush.msra.mxu0 %v2777
    %v2779 = vand.u32 %v140, 4294901760
    %2780 = vmatpush.msra.mxu0 %v2779
    %v2781 = vand.u32 %v139, 4294901760
    %2782 = vmatpush.msra.mxu0 %v2781
    %v2783 = vand.u32 %v138, 4294901760
    %2784 = vmatpush.msra.mxu0 %v2783
    %v2785 = vand.u32 %v137, 4294901760
    %2786 = vmatpush.msra.mxu0 %v2785
    %v2787 = vand.u32 %v136, 4294901760
    %2788 = vmatpush.msra.mxu0 %v2787
    %v2789 = vand.u32 %v135, 4294901760
    %2790 = vmatpush.msra.mxu0 %v2789
    %v2791 = vand.u32 %v167, 4294901760
    %v2792 = vsub.f32 %v167, %v2791
    %v2793 = vand.u32 %v2792, 4294901760
    %2794 = vmatmul.f32.gmra.mxu0 %v2793
    %v2795 = vpop.f32.mrf.mxu0
    %v2796 = vadd.f32 %v2757, %v2795
    %2797 = vdwg.mxu0
    %v2798 = vand.u32 %v150, 4294901760
    %v2799 = vsub.f32 %v150, %v2798
    %v2800 = vand.u32 %v2799, 4294901760
    %2801 = vmatpush.msra.mxu0 %v2800
    %v2802 = vand.u32 %v149, 4294901760
    %v2803 = vsub.f32 %v149, %v2802
    %v2804 = vand.u32 %v2803, 4294901760
    %2805 = vmatpush.msra.mxu0 %v2804
    %v2806 = vand.u32 %v148, 4294901760
    %v2807 = vsub.f32 %v148, %v2806
    %v2808 = vand.u32 %v2807, 4294901760
    %2809 = vmatpush.msra.mxu0 %v2808
    %v2810 = vand.u32 %v147, 4294901760
    %v2811 = vsub.f32 %v147, %v2810
    %v2812 = vand.u32 %v2811, 4294901760
    %2813 = vmatpush.msra.mxu0 %v2812
    %v2814 = vand.u32 %v146, 4294901760
    %v2815 = vsub.f32 %v146, %v2814
    %v2816 = vand.u32 %v2815, 4294901760
    %2817 = vmatpush.msra.mxu0 %v2816
    %v2818 = vand.u32 %v145, 4294901760
    %v2819 = vsub.f32 %v145, %v2818
    %v2820 = vand.u32 %v2819, 4294901760
    %2821 = vmatpush.msra.mxu0 %v2820
    %v2822 = vand.u32 %v144, 4294901760
    %v2823 = vsub.f32 %v144, %v2822
    %v2824 = vand.u32 %v2823, 4294901760
    %2825 = vmatpush.msra.mxu0 %v2824
    %v2826 = vand.u32 %v143, 4294901760
    %v2827 = vsub.f32 %v143, %v2826
    %v2828 = vand.u32 %v2827, 4294901760
    %2829 = vmatpush.msra.mxu0 %v2828
    %v2830 = vand.u32 %v142, 4294901760
    %v2831 = vsub.f32 %v142, %v2830
    %v2832 = vand.u32 %v2831, 4294901760
    %2833 = vmatpush.msra.mxu0 %v2832
    %v2834 = vand.u32 %v141, 4294901760
    %v2835 = vsub.f32 %v141, %v2834
    %v2836 = vand.u32 %v2835, 4294901760
    %2837 = vmatpush.msra.mxu0 %v2836
    %v2838 = vand.u32 %v140, 4294901760
    %v2839 = vsub.f32 %v140, %v2838
    %v2840 = vand.u32 %v2839, 4294901760
    %2841 = vmatpush.msra.mxu0 %v2840
    %v2842 = vand.u32 %v139, 4294901760
    %v2843 = vsub.f32 %v139, %v2842
    %v2844 = vand.u32 %v2843, 4294901760
    %2845 = vmatpush.msra.mxu0 %v2844
    %v2846 = vand.u32 %v138, 4294901760
    %v2847 = vsub.f32 %v138, %v2846
    %v2848 = vand.u32 %v2847, 4294901760
    %2849 = vmatpush.msra.mxu0 %v2848
    %v2850 = vand.u32 %v137, 4294901760
    %v2851 = vsub.f32 %v137, %v2850
    %v2852 = vand.u32 %v2851, 4294901760
    %2853 = vmatpush.msra.mxu0 %v2852
    %v2854 = vand.u32 %v136, 4294901760
    %v2855 = vsub.f32 %v136, %v2854
    %v2856 = vand.u32 %v2855, 4294901760
    %2857 = vmatpush.msra.mxu0 %v2856
    %v2858 = vand.u32 %v135, 4294901760
    %v2859 = vsub.f32 %v135, %v2858
    %v2860 = vand.u32 %v2859, 4294901760
    %2861 = vmatpush.msra.mxu0 %v2860
    %v2862 = vand.u32 %v167, 4294901760
    %2863 = vmatmul.f32.gmra.mxu0 %v2862
    %v2864 = vpop.f32.mrf.mxu0
    %v2865 = vadd.f32 %v2796, %v2864
    %2866 = vdwg.mxu0
    %v2867 = vand.u32 %v150, 4294901760
    %2868 = vmatpush.msra.mxu0 %v2867
    %v2869 = vand.u32 %v149, 4294901760
    %2870 = vmatpush.msra.mxu0 %v2869
    %v2871 = vand.u32 %v148, 4294901760
    %2872 = vmatpush.msra.mxu0 %v2871
    %v2873 = vand.u32 %v147, 4294901760
    %2874 = vmatpush.msra.mxu0 %v2873
    %v2875 = vand.u32 %v146, 4294901760
    %2876 = vmatpush.msra.mxu0 %v2875
    %v2877 = vand.u32 %v145, 4294901760
    %2878 = vmatpush.msra.mxu0 %v2877
    %v2879 = vand.u32 %v144, 4294901760
    %2880 = vmatpush.msra.mxu0 %v2879
    %v2881 = vand.u32 %v143, 4294901760
    %2882 = vmatpush.msra.mxu0 %v2881
    %v2883 = vand.u32 %v142, 4294901760
    %2884 = vmatpush.msra.mxu0 %v2883
    %v2885 = vand.u32 %v141, 4294901760
    %2886 = vmatpush.msra.mxu0 %v2885
    %v2887 = vand.u32 %v140, 4294901760
    %2888 = vmatpush.msra.mxu0 %v2887
    %v2889 = vand.u32 %v139, 4294901760
    %2890 = vmatpush.msra.mxu0 %v2889
    %v2891 = vand.u32 %v138, 4294901760
    %2892 = vmatpush.msra.mxu0 %v2891
    %v2893 = vand.u32 %v137, 4294901760
    %2894 = vmatpush.msra.mxu0 %v2893
    %v2895 = vand.u32 %v136, 4294901760
    %2896 = vmatpush.msra.mxu0 %v2895
    %v2897 = vand.u32 %v135, 4294901760
    %2898 = vmatpush.msra.mxu0 %v2897
    %v2899 = vand.u32 %v167, 4294901760
    %2900 = vmatmul.f32.gmra.mxu0 %v2899
    %v2901 = vpop.f32.mrf.mxu0
    %v2902 = vadd.f32 %v2865, %v2901
    %2903 = vdwg.mxu0
    %v2904 = vxor.u32 %v2902, 2147483648
    %v2905 = vmul.f32 %v2904, 1.442695
    %v2906 = vpow.pop %v2905
    %v2907 = vadd.f32 %v2906, 1.0
    %v2908 = vrcp.pop %v2907
    %v2909 = vmul.f32 %v2907, %v2908
    %v2910 = vsub.f32 1.0, %v2909
    %v2911 = vmul.f32 %v2908, %v2910
    %v2912 = vadd.f32 %v2908, %v2911
    %vm2913 = vweird.f32 %v2907
    %vm2914 = vweird.f32 %v2908
    %vm2915 = vmor %vm2913, %vm2914
    %v2916 = vsel %vm2915, %v2908, %v2912
    %v2917 = vand.u32 2147483647, %v2907
    %vm2918 = vcmp.eq.f32.partialorder %v2917, 8.507059e+37
    %v2919 = vand.u32 %v2907, 2147483648
    %v2920 = vor.u32 1.1754944e-38, %v2919
    %v2921 = vsel %vm2918, %v2920, %v2916
    %v2922 = vmul.f32 1.0, %v2921
    %v2923 = vld [vmem:[%s3] sm:$0xff]
    %v2924 = vld [vmem:[%s3 + $0x8] sm:$0xff]
    %v2925 = vld [vmem:[%s3 + $0x10] sm:$0xff]
    %v2926 = vld [vmem:[%s3 + $0x18] sm:$0xff]
    %v2927 = vld [vmem:[%s4] sm:$0x1]
    %v2929 = vperm.slane %v2927, 0
    %vm2931 = vcmask 261120
    %v2933 = vsel %vm2931, %v2922, 0
    %2935 = vmatpush.msra.mxu0 0.0
    %2936 = vmatpush.msra.mxu0 0.0
    %2937 = vmatpush.msra.mxu0 0.0
    %2938 = vmatpush.msra.mxu0 0.0
    %2939 = vmatpush.msra.mxu0 0.0
    %2940 = vmatpush.msra.mxu0 0.0
    %2941 = vmatpush.msra.mxu0 0.0
    %2942 = vmatpush.msra.mxu0 0.0
    %2943 = vmatpush.msra.mxu0 0.0
    %2944 = vmatpush.msra.mxu0 0.0
    %2945 = vmatpush.msra.mxu0 0.0
    %2946 = vmatpush.msra.mxu0 0.0
    %v2947 = vand.u32 %v2926, 4294901760
    %2948 = vmatpush.msra.mxu0 %v2947
    %v2949 = vand.u32 %v2925, 4294901760
    %2950 = vmatpush.msra.mxu0 %v2949
    %v2951 = vand.u32 %v2924, 4294901760
    %2952 = vmatpush.msra.mxu0 %v2951
    %v2953 = vand.u32 %v2923, 4294901760
    %2954 = vmatpush.msra.mxu0 %v2953
    %v2955 = vand.u32 %v2933, 4294901760
    %v2956 = vsub.f32 %v2933, %v2955
    %v2957 = vand.u32 %v2956, 4294901760
    %v2958 = vsub.f32 %v2956, %v2957
    %v2959 = vand.u32 %v2958, 4294901760
    %2960 = vmatmul.f32.gmra.mxu0 %v2959
    %v2961 = vpop.f32.mrf.mxu0
    %v2962 = vadd.f32 %v2929, %v2961
    %2963 = vdwg.mxu0
    %2964 = vmatpush.msra.mxu0 0.0
    %2965 = vmatpush.msra.mxu0 0.0
    %2966 = vmatpush.msra.mxu0 0.0
    %2967 = vmatpush.msra.mxu0 0.0
    %2968 = vmatpush.msra.mxu0 0.0
    %2969 = vmatpush.msra.mxu0 0.0
    %2970 = vmatpush.msra.mxu0 0.0
    %2971 = vmatpush.msra.mxu0 0.0
    %2972 = vmatpush.msra.mxu0 0.0
    %2973 = vmatpush.msra.mxu0 0.0
    %2974 = vmatpush.msra.mxu0 0.0
    %2975 = vmatpush.msra.mxu0 0.0
    %v2976 = vand.u32 %v2926, 4294901760
    %v2977 = vsub.f32 %v2926, %v2976
    %v2978 = vand.u32 %v2977, 4294901760
    %v2979 = vsub.f32 %v2977, %v2978
    %v2980 = vand.u32 %v2979, 4294901760
    %2981 = vmatpush.msra.mxu0 %v2980
    %v2982 = vand.u32 %v2925, 4294901760
    %v2983 = vsub.f32 %v2925, %v2982
    %v2984 = vand.u32 %v2983, 4294901760
    %v2985 = vsub.f32 %v2983, %v2984
    %v2986 = vand.u32 %v2985, 4294901760
    %2987 = vmatpush.msra.mxu0 %v2986
    %v2988 = vand.u32 %v2924, 4294901760
    %v2989 = vsub.f32 %v2924, %v2988
    %v2990 = vand.u32 %v2989, 4294901760
    %v2991 = vsub.f32 %v2989, %v2990
    %v2992 = vand.u32 %v2991, 4294901760
    %2993 = vmatpush.msra.mxu0 %v2992
    %v2994 = vand.u32 %v2923, 4294901760
    %v2995 = vsub.f32 %v2923, %v2994
    %v2996 = vand.u32 %v2995, 4294901760
    %v2997 = vsub.f32 %v2995, %v2996
    %v2998 = vand.u32 %v2997, 4294901760
    %2999 = vmatpush.msra.mxu0 %v2998
    %v3000 = vand.u32 %v2933, 4294901760
    %3001 = vmatmul.f32.gmra.mxu0 %v3000
    %v3002 = vpop.f32.mrf.mxu0
    %v3003 = vadd.f32 %v2962, %v3002
    %3004 = vdwg.mxu0
    %3005 = vmatpush.msra.mxu0 0.0
    %3006 = vmatpush.msra.mxu0 0.0
    %3007 = vmatpush.msra.mxu0 0.0
    %3008 = vmatpush.msra.mxu0 0.0
    %3009 = vmatpush.msra.mxu0 0.0
    %3010 = vmatpush.msra.mxu0 0.0
    %3011 = vmatpush.msra.mxu0 0.0
    %3012 = vmatpush.msra.mxu0 0.0
    %3013 = vmatpush.msra.mxu0 0.0
    %3014 = vmatpush.msra.mxu0 0.0
    %3015 = vmatpush.msra.mxu0 0.0
    %3016 = vmatpush.msra.mxu0 0.0
    %v3017 = vand.u32 %v2926, 4294901760
    %v3018 = vsub.f32 %v2926, %v3017
    %3019 = vmatpush.msra.mxu0 %v3018
    %v3020 = vand.u32 %v2925, 4294901760
    %v3021 = vsub.f32 %v2925, %v3020
    %3022 = vmatpush.msra.mxu0 %v3021
    %v3023 = vand.u32 %v2924, 4294901760
    %v3024 = vsub.f32 %v2924, %v3023
    %3025 = vmatpush.msra.mxu0 %v3024
    %v3026 = vand.u32 %v2923, 4294901760
    %v3027 = vsub.f32 %v2923, %v3026
    %3028 = vmatpush.msra.mxu0 %v3027
    %v3029 = vand.u32 %v2933, 4294901760
    %v3030 = vsub.f32 %v2933, %v3029
    %3031 = vmatmul.f32.gmra.mxu0 %v3030
    %v3032 = vpop.f32.mrf.mxu0
    %v3033 = vadd.f32 %v3003, %v3032
    %3034 = vdwg.mxu0
    %3035 = vmatpush.msra.mxu0 0.0
    %3036 = vmatpush.msra.mxu0 0.0
    %3037 = vmatpush.msra.mxu0 0.0
    %3038 = vmatpush.msra.mxu0 0.0
    %3039 = vmatpush.msra.mxu0 0.0
    %3040 = vmatpush.msra.mxu0 0.0
    %3041 = vmatpush.msra.mxu0 0.0
    %3042 = vmatpush.msra.mxu0 0.0
    %3043 = vmatpush.msra.mxu0 0.0
    %3044 = vmatpush.msra.mxu0 0.0
    %3045 = vmatpush.msra.mxu0 0.0
    %3046 = vmatpush.msra.mxu0 0.0
    %v3047 = vand.u32 %v2926, 4294901760
    %3048 = vmatpush.msra.mxu0 %v3047
    %v3049 = vand.u32 %v2925, 4294901760
    %3050 = vmatpush.msra.mxu0 %v3049
    %v3051 = vand.u32 %v2924, 4294901760
    %3052 = vmatpush.msra.mxu0 %v3051
    %v3053 = vand.u32 %v2923, 4294901760
    %3054 = vmatpush.msra.mxu0 %v3053
    %v3055 = vand.u32 %v2933, 4294901760
    %v3056 = vsub.f32 %v2933, %v3055
    %v3057 = vand.u32 %v3056, 4294901760
    %3058 = vmatmul.f32.gmra.mxu0 %v3057
    %v3059 = vpop.f32.mrf.mxu0
    %v3060 = vadd.f32 %v3033, %v3059
    %3061 = vdwg.mxu0
    %3062 = vmatpush.msra.mxu0 0.0
    %3063 = vmatpush.msra.mxu0 0.0
    %3064 = vmatpush.msra.mxu0 0.0
    %3065 = vmatpush.msra.mxu0 0.0
    %3066 = vmatpush.msra.mxu0 0.0
    %3067 = vmatpush.msra.mxu0 0.0
    %3068 = vmatpush.msra.mxu0 0.0
    %3069 = vmatpush.msra.mxu0 0.0
    %3070 = vmatpush.msra.mxu0 0.0
    %3071 = vmatpush.msra.mxu0 0.0
    %3072 = vmatpush.msra.mxu0 0.0
    %3073 = vmatpush.msra.mxu0 0.0
    %v3074 = vand.u32 %v2926, 4294901760
    %v3075 = vsub.f32 %v2926, %v3074
    %v3076 = vand.u32 %v3075, 4294901760
    %3077 = vmatpush.msra.mxu0 %v3076
    %v3078 = vand.u32 %v2925, 4294901760
    %v3079 = vsub.f32 %v2925, %v3078
    %v3080 = vand.u32 %v3079, 4294901760
    %3081 = vmatpush.msra.mxu0 %v3080
    %v3082 = vand.u32 %v2924, 4294901760
    %v3083 = vsub.f32 %v2924, %v3082
    %v3084 = vand.u32 %v3083, 4294901760
    %3085 = vmatpush.msra.mxu0 %v3084
    %v3086 = vand.u32 %v2923, 4294901760
    %v3087 = vsub.f32 %v2923, %v3086
    %v3088 = vand.u32 %v3087, 4294901760
    %3089 = vmatpush.msra.mxu0 %v3088
    %v3090 = vand.u32 %v2933, 4294901760
    %3091 = vmatmul.f32.gmra.mxu0 %v3090
    %v3092 = vpop.f32.mrf.mxu0
    %v3093 = vadd.f32 %v3060, %v3092
    %3094 = vdwg.mxu0
    %3095 = vmatpush.msra.mxu0 0.0
    %3096 = vmatpush.msra.mxu0 0.0
    %3097 = vmatpush.msra.mxu0 0.0
    %3098 = vmatpush.msra.mxu0 0.0
    %3099 = vmatpush.msra.mxu0 0.0
    %3100 = vmatpush.msra.mxu0 0.0
    %3101 = vmatpush.msra.mxu0 0.0
    %3102 = vmatpush.msra.mxu0 0.0
    %3103 = vmatpush.msra.mxu0 0.0
    %3104 = vmatpush.msra.mxu0 0.0
    %3105 = vmatpush.msra.mxu0 0.0
    %3106 = vmatpush.msra.mxu0 0.0
    %v3107 = vand.u32 %v2926, 4294901760
    %3108 = vmatpush.msra.mxu0 %v3107
    %v3109 = vand.u32 %v2925, 4294901760
    %3110 = vmatpush.msra.mxu0 %v3109
    %v3111 = vand.u32 %v2924, 4294901760
    %3112 = vmatpush.msra.mxu0 %v3111
    %v3113 = vand.u32 %v2923, 4294901760
    %3114 = vmatpush.msra.mxu0 %v3113
    %v3115 = vand.u32 %v2933, 4294901760
    %3116 = vmatmul.f32.gmra.mxu0 %v3115
    %v3117 = vpop.f32.mrf.mxu0
    %v3118 = vadd.f32 %v3093, %v3117
    %3119 = vdwg.mxu0
    %vm3120 = vcmask 74752
    %3121 = vst.msk [vmem:[#allocation2] sm:$0x3] %vm3120, %v3118
    // Predicated region
    $region22: #{tpu_custom_call.1} parent=1 // pred_check
      _
    $region23: #{tpu_custom_call.1} parent=1 // pred_check_branch
      %3123 = sbr.rel (0) target = $region25
    $region24: #{tpu_custom_call.1} parent=1 // pred_region
      %3125 = vsyncadd [#allocation3], 0
      %s3127 = sshll.u32 [#allocation2], 4
      %s3128 = int_to_ptr.vmem [resolvable:$true] %s3127
      %s3129 = sshll.u32 %s5, 4
      %s3130 = int_to_ptr.hbm [resolvable:$true] %s3129
      %3132 = dma.vmem_to_hbm [thread:$0]  %s3128, 32, %s3130, [#allocation3]
    $region25: #{tpu_custom_call.1} parent=1 // pred_fallthru
      _
    // Predicated region
    $region26: #{tpu_custom_call.1} parent=1 // pred_check
      _
    $region27: #{tpu_custom_call.1} parent=1 // pred_check_branch
      %3134 = sbr.rel (0) target = $region29
    $region28: #{tpu_custom_call.1} parent=1 // pred_region
      %3136 = dma.done [#allocation3], 32
    $region29: #{tpu_custom_call.1} parent=1 // pred_fallthru
      _
    %3137 = vsyncpa [#allocation3], 1

</llo_original>
